<compile_context>
chip_gen: v6e
topology: v6e:2x2x1
jax: 0.10.0
libtpu: 0.0.40
codegen_flags: <defaults>
</compile_context>

<pallas_src>
import math

import jax
import jax.numpy as jnp
from jax.experimental import pallas as pl
from jax.experimental.pallas import tpu as pltpu

# --- model / layout constants -------------------------------------------------
HIDDEN = 16          # LSTM hidden size (nn.LSTM(hidden_size=16))
HG = 32              # per-gate lane stripe (HIDDEN padded to 32 lanes)
G4 = 4 * HG          # 128: packed gate width [ i | f | g | o ] == slab lane width
FC1 = 128            # fc1 width (exactly one 128-lane stripe)
IP = 128             # lane-padded input-feature width for x @ W_ih
OP = 128             # lane-padded q width (sliced to num_outputs in the wrapper)

# Row offsets of each parameter block inside the packed (ROWS, 128) bf16 slab.
R_WIH = 0               # (IP,  G4) input->gates   (rows [0:num_inputs) used)
R_WHH = R_WIH + IP      # (HG,  G4) hidden->gates  (rows [0:HIDDEN) used)
R_B = R_WHH + HG        # (8,   G4) row 0 = b_ih + b_hh
R_FC1W = R_B + 8        # (HG,  FC1) fc1 weight    (rows [0:HIDDEN) used)
R_FC1B = R_FC1W + HG    # (8,   FC1) row 0
R_FC2W = R_FC1B + 8     # (FC1, OP)  fc2 weight    (cols [0:num_outputs) used)
R_FC2B = R_FC2W + FC1   # (8,   OP)  row 0
ROWS = R_FC2B + 8       # 344 rows total (multiple of 8) -> ~86 KiB in bf16


def drqn_kernel(x_ref, h0_ref, c0_ref, p_ref,
                q_ref, h_out_ref, c_out_ref,
                gx_ref, hs_ref):
    """One batch block: x_ref is time-major (T*BLK, IP) bf16, slab is bf16."""
    BLK = h0_ref.shape[0]
    T = x_ref.shape[0] // BLK

    # Gate bias (row 0 of the bias block), upcast to f32 once.
    b = p_ref[R_B:R_B + 1, :].astype(jnp.float32)                   # (1, 128)

    # Hoisted input projection for all timesteps: one bf16 MXU call, written to
    # an explicit VMEM scratch so its footprint is deliberate (review item 6).
    gx_ref[...] = jnp.dot(x_ref[...], p_ref[R_WIH:R_WIH + IP, :],
                          preferred_element_type=jnp.float32) + b   # (T*BLK, 128)

    h = h0_ref[...]                                                  # (BLK, HG) f32
    c = c0_ref[...]
    w_hh = p_ref[R_WHH:R_WHH + HG, :]                                # (HG, 128) bf16

    # Fully-unrolled recurrence; only h @ W_hh (one MXU tile) is serial.
    for t in range(T):
        gates = gx_ref[t * BLK:(t + 1) * BLK, :] + jnp.dot(
            h.astype(jnp.bfloat16), w_hh,
            preferred_element_type=jnp.float32)                      # (BLK, 128) f32
        # One EUP sigmoid over the whole packed [i|f|g|o] vreg; the g-gate
        # columns are pre-scaled by 2 in pack_params so tanh(a) = 2*sig(2a)-1.
        s = jax.nn.sigmoid(gates)
        i_g = s[:, 0:HG]
        f_g = s[:, HG:2 * HG]
        g_g = 2.0 * s[:, 2 * HG:3 * HG] - 1.0
        o_g = s[:, 3 * HG:4 * HG]
        c = f_g * c + i_g * g_g
        h = o_g * jnp.tanh(c)
        # BLK is a multiple of 8 -> full, aligned sublane-tile store (no masks).
        hs_ref[t * BLK:(t + 1) * BLK, :] = h

    # fc1 + ReLU, then fc2 — one lane-dense (T*BLK, *) slab pass on the MXU.
    hs = hs_ref[...].astype(jnp.bfloat16)                            # (T*BLK, HG)
    fc1_b = p_ref[R_FC1B:R_FC1B + 1, :].astype(jnp.float32)
    fc2_b = p_ref[R_FC2B:R_FC2B + 1, :].astype(jnp.float32)
    out = jnp.maximum(
        jnp.dot(hs, p_ref[R_FC1W:R_FC1W + HG, :],
                preferred_element_type=jnp.float32) + fc1_b, 0.0)    # (T*BLK, 128)
    q = jnp.dot(out.astype(jnp.bfloat16), p_ref[R_FC2W:R_FC2W + FC1, :],
                preferred_element_type=jnp.float32) + fc2_b          # (T*BLK, 128)
    q_ref[...] = q                                                   # unmasked lane-dense store
    h_out_ref[...] = h
    c_out_ref[...] = c


def drqn_forward(packed, x, hidden=None):
    """JAX wrapper mirroring DRQN.forward(x, hidden) -> (qvalue, (h, c))."""
    B, T, I = x.shape
    O = packed["num_outputs"]
    assert I <= IP and O <= OP

    BP = max(8, -(-B // 8) * 8)       # batch padded to a multiple of 8 sublanes
    BLK = math.gcd(BP, 512)           # rows per grid step: multiple of 8, <=512 (v7x VMEM-safe)
    nblk = BP // BLK

    # (B,T,I) -> padded (BP,T,IP) -> per-block time-major rows (nblk*T*BLK, IP) bf16.
    # TODO(synk): for very large batches, feed x in its natural layout via a
    # BlockSpec index_map instead of this host-side pad/reorder pass.
    x_p = jnp.pad(x.astype(jnp.float32), ((0, BP - B), (0, 0), (0, IP - I)))
    x_r = (x_p.reshape(nblk, BLK, T, IP).transpose(0, 2, 1, 3)
               .reshape(nblk * T * BLK, IP).astype(jnp.bfloat16))

    if hidden is None:
        h0 = jnp.zeros((BP, HG), jnp.float32)
        c0 = jnp.zeros((BP, HG), jnp.float32)
    else:
        h0 = jnp.pad(hidden[0].astype(jnp.float32).reshape(B, HIDDEN),
                     ((0, BP - B), (0, HG - HIDDEN)))
        c0 = jnp.pad(hidden[1].astype(jnp.float32).reshape(B, HIDDEN),
                     ((0, BP - B), (0, HG - HIDDEN)))

    q_p, h_p, c_p = pl.pallas_call(
        drqn_kernel,
        out_shape=(
            jax.ShapeDtypeStruct((BP * T, OP), jnp.float32),
            jax.ShapeDtypeStruct((BP, HG), jnp.float32),
            jax.ShapeDtypeStruct((BP, HG), jnp.float32),
        ),
        grid=(nblk,),
        in_specs=[
            pl.BlockSpec((T * BLK, IP), lambda i: (i, 0)),
            pl.BlockSpec((BLK, HG), lambda i: (i, 0)),
            pl.BlockSpec((BLK, HG), lambda i: (i, 0)),
            pl.BlockSpec((ROWS, G4), lambda i: (0, 0)),   # slab: constant index -> stays resident
        ],
        out_specs=(
            pl.BlockSpec((T * BLK, OP), lambda i: (i, 0)),
            pl.BlockSpec((BLK, HG), lambda i: (i, 0)),
            pl.BlockSpec((BLK, HG), lambda i: (i, 0)),
        ),
        scratch_shapes=[
            pltpu.VMEM((T * BLK, G4), jnp.float32),   # hoisted input-projection gates
            pltpu.VMEM((T * BLK, HG), jnp.float32),   # per-step hidden states (fully overwritten)
        ],
        # h0/c0 are freshly built padded arrays above, so donation is safe.
        input_output_aliases={1: 1, 2: 2},
        compiler_params=pltpu.CompilerParams(dimension_semantics=("parallel",)),
    )(x_r, h0, c0, packed["slab"])

    q = (q_p.reshape(nblk, T, BLK, OP).transpose(0, 2, 1, 3)
             .reshape(BP, T, OP)[:B, :, :O])                 # (B, T, O), batch-first
    h_n = h_p[:B, :HIDDEN][None]                             # (1, B, 16)
    c_n = c_p[:B, :HIDDEN][None]
    return q, (h_n, c_n)


def init_params(key, num_inputs, num_outputs):
    """Deterministic init matching the PyTorch module's parameter shapes (torch layout)."""
    ks = jax.random.split(key, 8)
    H = HIDDEN
    k = 1.0 / math.sqrt(H)
    w_ih = jax.random.uniform(ks[0], (4 * H, num_inputs), jnp.float32, -k, k)
    w_hh = jax.random.uniform(ks[1], (4 * H, H), jnp.float32, -k, k)
    b_ih = jax.random.uniform(ks[2], (4 * H,), jnp.float32, -k, k)
    b_hh = jax.random.uniform(ks[3], (4 * H,), jnp.float32, -k, k)

    def xavier_uniform(kk, fan_out, fan_in):
        bound = math.sqrt(6.0 / (fan_in + fan_out))
        return jax.random.uniform(kk, (fan_out, fan_in), jnp.float32, -bound, bound)

    fc1_w = xavier_uniform(ks[4], FC1, H)                     # (128, 16) torch layout
    fc1_b = jax.random.uniform(ks[5], (FC1,), jnp.float32,
                               -1.0 / math.sqrt(H), 1.0 / math.sqrt(H))
    fc2_w = xavier_uniform(ks[6], num_outputs, FC1)           # (O, 128) torch layout
    fc2_b = jax.random.uniform(ks[7], (num_outputs,), jnp.float32,
                               -1.0 / math.sqrt(FC1), 1.0 / math.sqrt(FC1))
    return dict(w_ih=w_ih, w_hh=w_hh, b_ih=b_ih, b_hh=b_hh,
                fc1_w=fc1_w, fc1_b=fc1_b, fc2_w=fc2_w, fc2_b=fc2_b)


def pack_params(params, num_inputs, num_outputs):
    """Pack all parameters into one (ROWS, 128) bf16 slab; each gate gets 32 lanes."""
    assert num_inputs <= IP and num_outputs <= OP and HIDDEN <= HG and FC1 == G4
    H = HIDDEN

    def gate_pack(mat):  # mat: (rows, 4H) torch gate order -> (rows, 4*HG)
        rows = mat.shape[0]
        out = jnp.zeros((rows, G4), jnp.float32)
        for g in range(4):
            blk = mat[:, g * H:(g + 1) * H]
            if g == 2:          # cell gate pre-scaled by 2: tanh(a) = 2*sigmoid(2a) - 1
                blk = 2.0 * blk
            out = out.at[:, g * HG:g * HG + H].set(blk)
        return out

    slab = jnp.zeros((ROWS, G4), jnp.float32)
    slab = slab.at[R_WIH:R_WIH + num_inputs].set(gate_pack(params["w_ih"].T))
    slab = slab.at[R_WHH:R_WHH + H].set(gate_pack(params["w_hh"].T))
    slab = slab.at[R_B].set(gate_pack((params["b_ih"] + params["b_hh"])[None, :])[0])
    slab = slab.at[R_FC1W:R_FC1W + H, 0:FC1].set(params["fc1_w"].T)
    slab = slab.at[R_FC1B, 0:FC1].set(params["fc1_b"])
    slab = slab.at[R_FC2W:R_FC2W + FC1, 0:num_outputs].set(params["fc2_w"].T)
    slab = slab.at[R_FC2B, 0:num_outputs].set(params["fc2_b"])
    return {"slab": slab.astype(jnp.bfloat16), "num_outputs": num_outputs}


def drqn_reference(params, x, hidden=None):
    """Pure-JAX reference mirroring the kernel's bf16 storage/matmul-input rounding."""
    B, T, _ = x.shape
    H = HIDDEN
    bf = lambda a: a.astype(jnp.bfloat16).astype(jnp.float32)
    w_ih = bf(params["w_ih"]).T
    w_hh = bf(params["w_hh"]).T
    b = bf(params["b_ih"] + params["b_hh"])[None, :]
    fc1_w = bf(params["fc1_w"]).T
    fc1_b = bf(params["fc1_b"])
    fc2_w = bf(params["fc2_w"]).T
    fc2_b = bf(params["fc2_b"])
    xb = bf(x)
    if hidden is None:
        h = jnp.zeros((B, H), jnp.float32)
        c = jnp.zeros((B, H), jnp.float32)
    else:
        h = hidden[0].astype(jnp.float32).reshape(B, H)
        c = hidden[1].astype(jnp.float32).reshape(B, H)
    hs = []
    for t in range(T):
        gates = xb[:, t, :] @ w_ih + bf(h) @ w_hh + b
        i_g = jax.nn.sigmoid(gates[:, 0:H])
        f_g = jax.nn.sigmoid(gates[:, H:2 * H])
        g_g = jnp.tanh(gates[:, 2 * H:3 * H])
        o_g = jax.nn.sigmoid(gates[:, 3 * H:4 * H])
        c = f_g * c + i_g * g_g
        h = o_g * jnp.tanh(c)
        hs.append(h)
    hs = jnp.stack(hs, axis=1)                                   # (B, T, H)
    out = jnp.maximum(bf(hs) @ fc1_w + fc1_b, 0.0)
    q = bf(out) @ fc2_w + fc2_b
    return q, (h[None], c[None])


if __name__ == "__main__":
    num_inputs, num_outputs = 4, 2
    B, T = 2, 8

    key = jax.random.PRNGKey(0)
    k_params, k_x, k_h, k_c = jax.random.split(key, 4)
    params = init_params(k_params, num_inputs, num_outputs)
    packed = pack_params(params, num_inputs, num_outputs)

    x = jax.random.normal(k_x, (B, T, num_inputs), jnp.float32)
    h0 = jax.random.normal(k_h, (1, B, HIDDEN), jnp.float32)
    c0 = jax.random.normal(k_c, (1, B, HIDDEN), jnp.float32)

    # With an explicit hidden state (as in train_model).
    q, (h_n, c_n) = drqn_forward(packed, x, (h0, c0))
    jax.block_until_ready((q, h_n, c_n))

    # And with hidden=None (default zeros), like the plain forward call.
    q0, (h_n0, c_n0) = drqn_forward(packed, x, None)
    jax.block_until_ready((q0, h_n0, c_n0))

    # A second batch size to exercise the batch padding / un-padding path.
    B2 = 5
    x2 = jax.random.normal(jax.random.PRNGKey(7), (B2, T, num_inputs), jnp.float32)
    q2, (h_n2, c_n2) = drqn_forward(packed, x2, None)
    jax.block_until_ready((q2, h_n2, c_n2))

    # Verify against the pure-JAX reference.
    q_ref, (h_ref, c_ref) = drqn_reference(params, x, (h0, c0))
    q_ref0, (h_ref0, c_ref0) = drqn_reference(params, x, None)
    q_ref2, (h_ref2, c_ref2) = drqn_reference(params, x2, None)

    assert q.shape == (B, T, num_outputs)
    assert h_n.shape == (1, B, HIDDEN) and c_n.shape == (1, B, HIDDEN)
    assert q2.shape == (B2, T, num_outputs)
    atol = 2e-3
    assert jnp.allclose(q, q_ref, atol=atol)
    assert jnp.allclose(h_n, h_ref, atol=atol)
    assert jnp.allclose(c_n, c_ref, atol=atol)
    assert jnp.allclose(q0, q_ref0, atol=atol)
    assert jnp.allclose(h_n0, h_ref0, atol=atol)
    assert jnp.allclose(c_n0, c_ref0, atol=atol)
    assert jnp.allclose(q2, q_ref2, atol=atol)
    assert jnp.allclose(h_n2, h_ref2, atol=atol)
    assert jnp.allclose(c_n2, c_ref2, atol=atol)

    print("KERNEL_OK")
</pallas_src>

<mosaic_0001>
module attributes {stable_mosaic.version = 11 : i64} {
  func.func @drqn_kernel(%arg0: i32, %arg1: memref<64x128xbf16, #tpu.memory_space<vmem>>, %arg2: memref<8x32xf32, #tpu.memory_space<vmem>>, %arg3: memref<8x32xf32, #tpu.memory_space<vmem>>, %arg4: memref<344x128xbf16, #tpu.memory_space<vmem>>, %arg5: memref<64x128xf32, #tpu.memory_space<vmem>>, %arg6: memref<8x32xf32, #tpu.memory_space<vmem>>, %arg7: memref<8x32xf32, #tpu.memory_space<vmem>>, %arg8: memref<64x128xf32, #tpu.memory_space<vmem>>, %arg9: memref<64x32xf32, #tpu.memory_space<vmem>>) attributes {dimension_semantics = [#tpu.dimension_semantics<parallel>], iteration_bounds = array<i64: 1>, scalar_prefetch = 0 : i64, scratch_operands = 2 : i64, tpu.core_type = #tpu.core_type<tc>, window_params = [{transform_indices = @transform_0, window_bounds = array<i64: 64, 128>}, {transform_indices = @transform_1, window_bounds = array<i64: 8, 32>}, {transform_indices = @transform_2, window_bounds = array<i64: 8, 32>}, {pipeline_mode = #tpu.pipeline_mode<synchronous>, transform_indices = @transform_3, window_bounds = array<i64: 344, 128>}, {transform_indices = @transform_4, window_bounds = array<i64: 64, 128>}, {transform_indices = @transform_5, window_bounds = array<i64: 8, 32>}, {transform_indices = @transform_6, window_bounds = array<i64: 8, 32>}]} {
    %c160 = arith.constant 160 : index
    %c0 = arith.constant 0 : index
    %0 = vector.load %arg4[%c160, %c0] : memref<344x128xbf16, #tpu.memory_space<vmem>>, vector<1x128xbf16>
    %1 = arith.extf %0 : vector<1x128xbf16> to vector<1x128xf32>
    %c0_0 = arith.constant 0 : index
    %c0_1 = arith.constant 0 : index
    %2 = vector.load %arg1[%c0_0, %c0_1] : memref<64x128xbf16, #tpu.memory_space<vmem>>, vector<64x128xbf16>
    %c0_2 = arith.constant 0 : index
    %c0_3 = arith.constant 0 : index
    %3 = vector.load %arg4[%c0_2, %c0_3] : memref<344x128xbf16, #tpu.memory_space<vmem>>, vector<128x128xbf16>
    %cst = arith.constant dense<0.000000e+00> : vector<64x128xf32>
    %4 = tpu.matmul %2, %3, %cst {dimension_numbers = #tpu.dot_dimension_numbers<[1], [0], [0], [1], [0, 0, 1, 1], [], []>} : vector<64x128xbf16>, vector<128x128xbf16>, vector<64x128xf32> -> vector<64x128xf32>
    %5 = vector.broadcast %1 : vector<1x128xf32> to vector<64x128xf32>
    %6 = arith.addf %4, %5 : vector<64x128xf32>
    %c0_4 = arith.constant 0 : index
    %c0_5 = arith.constant 0 : index
    %7 = vector.load %arg8[%c0_4, %c0_5] : memref<64x128xf32, #tpu.memory_space<vmem>>, vector<64x128xf32>
    tpu.vector_store %arg8[%c0_4, %c0_5], %6 {strides = array<i32>} : memref<64x128xf32, #tpu.memory_space<vmem>>, vector<64x128xf32>,
    %c0_6 = arith.constant 0 : index
    %c0_7 = arith.constant 0 : index
    %8 = vector.load %arg2[%c0_6, %c0_7] : memref<8x32xf32, #tpu.memory_space<vmem>>, vector<8x32xf32>
    %c0_8 = arith.constant 0 : index
    %c0_9 = arith.constant 0 : index
    %9 = vector.load %arg3[%c0_8, %c0_9] : memref<8x32xf32, #tpu.memory_space<vmem>>, vector<8x32xf32>
    %c128 = arith.constant 128 : index
    %c0_10 = arith.constant 0 : index
    %10 = vector.load %arg4[%c128, %c0_10] : memref<344x128xbf16, #tpu.memory_space<vmem>>, vector<32x128xbf16>
    %c0_11 = arith.constant 0 : index
    %c0_12 = arith.constant 0 : index
    %11 = vector.load %arg8[%c0_11, %c0_12] : memref<64x128xf32, #tpu.memory_space<vmem>>, vector<8x128xf32>
    %12 = arith.truncf %8 : vector<8x32xf32> to vector<8x32xbf16>
    %cst_13 = arith.constant dense<0.000000e+00> : vector<8x128xf32>
    %13 = tpu.matmul %12, %10, %cst_13 {dimension_numbers = #tpu.dot_dimension_numbers<[1], [0], [0], [1], [0, 0, 1, 1], [], []>} : vector<8x32xbf16>, vector<32x128xbf16>, vector<8x128xf32> -> vector<8x128xf32>
    %14 = arith.addf %11, %13 : vector<8x128xf32>
    %15 = arith.negf %14 : vector<8x128xf32>
    %16 = math.exp %15 : vector<8x128xf32>
    %cst_14 = arith.constant 1.000000e+00 : f32
    %17 = vector.broadcast %cst_14 : f32 to vector<8x128xf32>
    %18 = arith.addf %17, %16 : vector<8x128xf32>
    %19 = arith.divf %17, %18 : vector<8x128xf32>
    %20 = vector.extract_strided_slice %19 {offsets = [0, 0], sizes = [8, 32], strides = [1, 1]} : vector<8x128xf32> to vector<8x32xf32>
    %21 = vector.extract_strided_slice %19 {offsets = [0, 32], sizes = [8, 32], strides = [1, 1]} : vector<8x128xf32> to vector<8x32xf32>
    %22 = vector.extract_strided_slice %19 {offsets = [0, 64], sizes = [8, 32], strides = [1, 1]} : vector<8x128xf32> to vector<8x32xf32>
    %cst_15 = arith.constant 2.000000e+00 : f32
    %23 = vector.broadcast %cst_15 : f32 to vector<8x32xf32>
    %24 = arith.mulf %23, %22 : vector<8x32xf32>
    %cst_16 = arith.constant 1.000000e+00 : f32
    %25 = vector.broadcast %cst_16 : f32 to vector<8x32xf32>
    %26 = arith.subf %24, %25 : vector<8x32xf32>
    %27 = vector.extract_strided_slice %19 {offsets = [0, 96], sizes = [8, 32], strides = [1, 1]} : vector<8x128xf32> to vector<8x32xf32>
    %28 = arith.mulf %21, %9 : vector<8x32xf32>
    %29 = arith.mulf %20, %26 : vector<8x32xf32>
    %30 = arith.addf %28, %29 : vector<8x32xf32>
    %31 = math.tanh %30 : vector<8x32xf32>
    %32 = arith.mulf %27, %31 : vector<8x32xf32>
    %c0_17 = arith.constant 0 : index
    %c0_18 = arith.constant 0 : index
    %33 = vector.load %arg9[%c0_17, %c0_18] : memref<64x32xf32, #tpu.memory_space<vmem>>, vector<8x32xf32>
    tpu.vector_store %arg9[%c0_17, %c0_18], %32 {strides = array<i32>} : memref<64x32xf32, #tpu.memory_space<vmem>>, vector<8x32xf32>,
    %c8 = arith.constant 8 : index
    %c0_19 = arith.constant 0 : index
    %34 = vector.load %arg8[%c8, %c0_19] : memref<64x128xf32, #tpu.memory_space<vmem>>, vector<8x128xf32>
    %35 = arith.truncf %32 : vector<8x32xf32> to vector<8x32xbf16>
    %cst_20 = arith.constant dense<0.000000e+00> : vector<8x128xf32>
    %36 = tpu.matmul %35, %10, %cst_20 {dimension_numbers = #tpu.dot_dimension_numbers<[1], [0], [0], [1], [0, 0, 1, 1], [], []>} : vector<8x32xbf16>, vector<32x128xbf16>, vector<8x128xf32> -> vector<8x128xf32>
    %37 = arith.addf %34, %36 : vector<8x128xf32>
    %38 = arith.negf %37 : vector<8x128xf32>
    %39 = math.exp %38 : vector<8x128xf32>
    %cst_21 = arith.constant 1.000000e+00 : f32
    %40 = vector.broadcast %cst_21 : f32 to vector<8x128xf32>
    %41 = arith.addf %40, %39 : vector<8x128xf32>
    %42 = arith.divf %40, %41 : vector<8x128xf32>
    %43 = vector.extract_strided_slice %42 {offsets = [0, 0], sizes = [8, 32], strides = [1, 1]} : vector<8x128xf32> to vector<8x32xf32>
    %44 = vector.extract_strided_slice %42 {offsets = [0, 32], sizes = [8, 32], strides = [1, 1]} : vector<8x128xf32> to vector<8x32xf32>
    %45 = vector.extract_strided_slice %42 {offsets = [0, 64], sizes = [8, 32], strides = [1, 1]} : vector<8x128xf32> to vector<8x32xf32>
    %cst_22 = arith.constant 2.000000e+00 : f32
    %46 = vector.broadcast %cst_22 : f32 to vector<8x32xf32>
    %47 = arith.mulf %46, %45 : vector<8x32xf32>
    %cst_23 = arith.constant 1.000000e+00 : f32
    %48 = vector.broadcast %cst_23 : f32 to vector<8x32xf32>
    %49 = arith.subf %47, %48 : vector<8x32xf32>
    %50 = vector.extract_strided_slice %42 {offsets = [0, 96], sizes = [8, 32], strides = [1, 1]} : vector<8x128xf32> to vector<8x32xf32>
    %51 = arith.mulf %44, %30 : vector<8x32xf32>
    %52 = arith.mulf %43, %49 : vector<8x32xf32>
    %53 = arith.addf %51, %52 : vector<8x32xf32>
    %54 = math.tanh %53 : vector<8x32xf32>
    %55 = arith.mulf %50, %54 : vector<8x32xf32>
    %c8_24 = arith.constant 8 : index
    %c0_25 = arith.constant 0 : index
    %56 = vector.load %arg9[%c8_24, %c0_25] : memref<64x32xf32, #tpu.memory_space<vmem>>, vector<8x32xf32>
    tpu.vector_store %arg9[%c8_24, %c0_25], %55 {strides = array<i32>} : memref<64x32xf32, #tpu.memory_space<vmem>>, vector<8x32xf32>,
    %c16 = arith.constant 16 : index
    %c0_26 = arith.constant 0 : index
    %57 = vector.load %arg8[%c16, %c0_26] : memref<64x128xf32, #tpu.memory_space<vmem>>, vector<8x128xf32>
    %58 = arith.truncf %55 : vector<8x32xf32> to vector<8x32xbf16>
    %cst_27 = arith.constant dense<0.000000e+00> : vector<8x128xf32>
    %59 = tpu.matmul %58, %10, %cst_27 {dimension_numbers = #tpu.dot_dimension_numbers<[1], [0], [0], [1], [0, 0, 1, 1], [], []>} : vector<8x32xbf16>, vector<32x128xbf16>, vector<8x128xf32> -> vector<8x128xf32>
    %60 = arith.addf %57, %59 : vector<8x128xf32>
    %61 = arith.negf %60 : vector<8x128xf32>
    %62 = math.exp %61 : vector<8x128xf32>
    %cst_28 = arith.constant 1.000000e+00 : f32
    %63 = vector.broadcast %cst_28 : f32 to vector<8x128xf32>
    %64 = arith.addf %63, %62 : vector<8x128xf32>
    %65 = arith.divf %63, %64 : vector<8x128xf32>
    %66 = vector.extract_strided_slice %65 {offsets = [0, 0], sizes = [8, 32], strides = [1, 1]} : vector<8x128xf32> to vector<8x32xf32>
    %67 = vector.extract_strided_slice %65 {offsets = [0, 32], sizes = [8, 32], strides = [1, 1]} : vector<8x128xf32> to vector<8x32xf32>
    %68 = vector.extract_strided_slice %65 {offsets = [0, 64], sizes = [8, 32], strides = [1, 1]} : vector<8x128xf32> to vector<8x32xf32>
    %cst_29 = arith.constant 2.000000e+00 : f32
    %69 = vector.broadcast %cst_29 : f32 to vector<8x32xf32>
    %70 = arith.mulf %69, %68 : vector<8x32xf32>
    %cst_30 = arith.constant 1.000000e+00 : f32
    %71 = vector.broadcast %cst_30 : f32 to vector<8x32xf32>
    %72 = arith.subf %70, %71 : vector<8x32xf32>
    %73 = vector.extract_strided_slice %65 {offsets = [0, 96], sizes = [8, 32], strides = [1, 1]} : vector<8x128xf32> to vector<8x32xf32>
    %74 = arith.mulf %67, %53 : vector<8x32xf32>
    %75 = arith.mulf %66, %72 : vector<8x32xf32>
    %76 = arith.addf %74, %75 : vector<8x32xf32>
    %77 = math.tanh %76 : vector<8x32xf32>
    %78 = arith.mulf %73, %77 : vector<8x32xf32>
    %c16_31 = arith.constant 16 : index
    %c0_32 = arith.constant 0 : index
    %79 = vector.load %arg9[%c16_31, %c0_32] : memref<64x32xf32, #tpu.memory_space<vmem>>, vector<8x32xf32>
    tpu.vector_store %arg9[%c16_31, %c0_32], %78 {strides = array<i32>} : memref<64x32xf32, #tpu.memory_space<vmem>>, vector<8x32xf32>,
    %c24 = arith.constant 24 : index
    %c0_33 = arith.constant 0 : index
    %80 = vector.load %arg8[%c24, %c0_33] : memref<64x128xf32, #tpu.memory_space<vmem>>, vector<8x128xf32>
    %81 = arith.truncf %78 : vector<8x32xf32> to vector<8x32xbf16>
    %cst_34 = arith.constant dense<0.000000e+00> : vector<8x128xf32>
    %82 = tpu.matmul %81, %10, %cst_34 {dimension_numbers = #tpu.dot_dimension_numbers<[1], [0], [0], [1], [0, 0, 1, 1], [], []>} : vector<8x32xbf16>, vector<32x128xbf16>, vector<8x128xf32> -> vector<8x128xf32>
    %83 = arith.addf %80, %82 : vector<8x128xf32>
    %84 = arith.negf %83 : vector<8x128xf32>
    %85 = math.exp %84 : vector<8x128xf32>
    %cst_35 = arith.constant 1.000000e+00 : f32
    %86 = vector.broadcast %cst_35 : f32 to vector<8x128xf32>
    %87 = arith.addf %86, %85 : vector<8x128xf32>
    %88 = arith.divf %86, %87 : vector<8x128xf32>
    %89 = vector.extract_strided_slice %88 {offsets = [0, 0], sizes = [8, 32], strides = [1, 1]} : vector<8x128xf32> to vector<8x32xf32>
    %90 = vector.extract_strided_slice %88 {offsets = [0, 32], sizes = [8, 32], strides = [1, 1]} : vector<8x128xf32> to vector<8x32xf32>
    %91 = vector.extract_strided_slice %88 {offsets = [0, 64], sizes = [8, 32], strides = [1, 1]} : vector<8x128xf32> to vector<8x32xf32>
    %cst_36 = arith.constant 2.000000e+00 : f32
    %92 = vector.broadcast %cst_36 : f32 to vector<8x32xf32>
    %93 = arith.mulf %92, %91 : vector<8x32xf32>
    %cst_37 = arith.constant 1.000000e+00 : f32
    %94 = vector.broadcast %cst_37 : f32 to vector<8x32xf32>
    %95 = arith.subf %93, %94 : vector<8x32xf32>
    %96 = vector.extract_strided_slice %88 {offsets = [0, 96], sizes = [8, 32], strides = [1, 1]} : vector<8x128xf32> to vector<8x32xf32>
    %97 = arith.mulf %90, %76 : vector<8x32xf32>
    %98 = arith.mulf %89, %95 : vector<8x32xf32>
    %99 = arith.addf %97, %98 : vector<8x32xf32>
    %100 = math.tanh %99 : vector<8x32xf32>
    %101 = arith.mulf %96, %100 : vector<8x32xf32>
    %c24_38 = arith.constant 24 : index
    %c0_39 = arith.constant 0 : index
    %102 = vector.load %arg9[%c24_38, %c0_39] : memref<64x32xf32, #tpu.memory_space<vmem>>, vector<8x32xf32>
    tpu.vector_store %arg9[%c24_38, %c0_39], %101 {strides = array<i32>} : memref<64x32xf32, #tpu.memory_space<vmem>>, vector<8x32xf32>,
    %c32 = arith.constant 32 : index
    %c0_40 = arith.constant 0 : index
    %103 = vector.load %arg8[%c32, %c0_40] : memref<64x128xf32, #tpu.memory_space<vmem>>, vector<8x128xf32>
    %104 = arith.truncf %101 : vector<8x32xf32> to vector<8x32xbf16>
    %cst_41 = arith.constant dense<0.000000e+00> : vector<8x128xf32>
    %105 = tpu.matmul %104, %10, %cst_41 {dimension_numbers = #tpu.dot_dimension_numbers<[1], [0], [0], [1], [0, 0, 1, 1], [], []>} : vector<8x32xbf16>, vector<32x128xbf16>, vector<8x128xf32> -> vector<8x128xf32>
    %106 = arith.addf %103, %105 : vector<8x128xf32>
    %107 = arith.negf %106 : vector<8x128xf32>
    %108 = math.exp %107 : vector<8x128xf32>
    %cst_42 = arith.constant 1.000000e+00 : f32
    %109 = vector.broadcast %cst_42 : f32 to vector<8x128xf32>
    %110 = arith.addf %109, %108 : vector<8x128xf32>
    %111 = arith.divf %109, %110 : vector<8x128xf32>
    %112 = vector.extract_strided_slice %111 {offsets = [0, 0], sizes = [8, 32], strides = [1, 1]} : vector<8x128xf32> to vector<8x32xf32>
    %113 = vector.extract_strided_slice %111 {offsets = [0, 32], sizes = [8, 32], strides = [1, 1]} : vector<8x128xf32> to vector<8x32xf32>
    %114 = vector.extract_strided_slice %111 {offsets = [0, 64], sizes = [8, 32], strides = [1, 1]} : vector<8x128xf32> to vector<8x32xf32>
    %cst_43 = arith.constant 2.000000e+00 : f32
    %115 = vector.broadcast %cst_43 : f32 to vector<8x32xf32>
    %116 = arith.mulf %115, %114 : vector<8x32xf32>
    %cst_44 = arith.constant 1.000000e+00 : f32
    %117 = vector.broadcast %cst_44 : f32 to vector<8x32xf32>
    %118 = arith.subf %116, %117 : vector<8x32xf32>
    %119 = vector.extract_strided_slice %111 {offsets = [0, 96], sizes = [8, 32], strides = [1, 1]} : vector<8x128xf32> to vector<8x32xf32>
    %120 = arith.mulf %113, %99 : vector<8x32xf32>
    %121 = arith.mulf %112, %118 : vector<8x32xf32>
    %122 = arith.addf %120, %121 : vector<8x32xf32>
    %123 = math.tanh %122 : vector<8x32xf32>
    %124 = arith.mulf %119, %123 : vector<8x32xf32>
    %c32_45 = arith.constant 32 : index
    %c0_46 = arith.constant 0 : index
    %125 = vector.load %arg9[%c32_45, %c0_46] : memref<64x32xf32, #tpu.memory_space<vmem>>, vector<8x32xf32>
    tpu.vector_store %arg9[%c32_45, %c0_46], %124 {strides = array<i32>} : memref<64x32xf32, #tpu.memory_space<vmem>>, vector<8x32xf32>,
    %c40 = arith.constant 40 : index
    %c0_47 = arith.constant 0 : index
    %126 = vector.load %arg8[%c40, %c0_47] : memref<64x128xf32, #tpu.memory_space<vmem>>, vector<8x128xf32>
    %127 = arith.truncf %124 : vector<8x32xf32> to vector<8x32xbf16>
    %cst_48 = arith.constant dense<0.000000e+00> : vector<8x128xf32>
    %128 = tpu.matmul %127, %10, %cst_48 {dimension_numbers = #tpu.dot_dimension_numbers<[1], [0], [0], [1], [0, 0, 1, 1], [], []>} : vector<8x32xbf16>, vector<32x128xbf16>, vector<8x128xf32> -> vector<8x128xf32>
    %129 = arith.addf %126, %128 : vector<8x128xf32>
    %130 = arith.negf %129 : vector<8x128xf32>
    %131 = math.exp %130 : vector<8x128xf32>
    %cst_49 = arith.constant 1.000000e+00 : f32
    %132 = vector.broadcast %cst_49 : f32 to vector<8x128xf32>
    %133 = arith.addf %132, %131 : vector<8x128xf32>
    %134 = arith.divf %132, %133 : vector<8x128xf32>
    %135 = vector.extract_strided_slice %134 {offsets = [0, 0], sizes = [8, 32], strides = [1, 1]} : vector<8x128xf32> to vector<8x32xf32>
    %136 = vector.extract_strided_slice %134 {offsets = [0, 32], sizes = [8, 32], strides = [1, 1]} : vector<8x128xf32> to vector<8x32xf32>
    %137 = vector.extract_strided_slice %134 {offsets = [0, 64], sizes = [8, 32], strides = [1, 1]} : vector<8x128xf32> to vector<8x32xf32>
    %cst_50 = arith.constant 2.000000e+00 : f32
    %138 = vector.broadcast %cst_50 : f32 to vector<8x32xf32>
    %139 = arith.mulf %138, %137 : vector<8x32xf32>
    %cst_51 = arith.constant 1.000000e+00 : f32
    %140 = vector.broadcast %cst_51 : f32 to vector<8x32xf32>
    %141 = arith.subf %139, %140 : vector<8x32xf32>
    %142 = vector.extract_strided_slice %134 {offsets = [0, 96], sizes = [8, 32], strides = [1, 1]} : vector<8x128xf32> to vector<8x32xf32>
    %143 = arith.mulf %136, %122 : vector<8x32xf32>
    %144 = arith.mulf %135, %141 : vector<8x32xf32>
    %145 = arith.addf %143, %144 : vector<8x32xf32>
    %146 = math.tanh %145 : vector<8x32xf32>
    %147 = arith.mulf %142, %146 : vector<8x32xf32>
    %c40_52 = arith.constant 40 : index
    %c0_53 = arith.constant 0 : index
    %148 = vector.load %arg9[%c40_52, %c0_53] : memref<64x32xf32, #tpu.memory_space<vmem>>, vector<8x32xf32>
    tpu.vector_store %arg9[%c40_52, %c0_53], %147 {strides = array<i32>} : memref<64x32xf32, #tpu.memory_space<vmem>>, vector<8x32xf32>,
    %c48 = arith.constant 48 : index
    %c0_54 = arith.constant 0 : index
    %149 = vector.load %arg8[%c48, %c0_54] : memref<64x128xf32, #tpu.memory_space<vmem>>, vector<8x128xf32>
    %150 = arith.truncf %147 : vector<8x32xf32> to vector<8x32xbf16>
    %cst_55 = arith.constant dense<0.000000e+00> : vector<8x128xf32>
    %151 = tpu.matmul %150, %10, %cst_55 {dimension_numbers = #tpu.dot_dimension_numbers<[1], [0], [0], [1], [0, 0, 1, 1], [], []>} : vector<8x32xbf16>, vector<32x128xbf16>, vector<8x128xf32> -> vector<8x128xf32>
    %152 = arith.addf %149, %151 : vector<8x128xf32>
    %153 = arith.negf %152 : vector<8x128xf32>
    %154 = math.exp %153 : vector<8x128xf32>
    %cst_56 = arith.constant 1.000000e+00 : f32
    %155 = vector.broadcast %cst_56 : f32 to vector<8x128xf32>
    %156 = arith.addf %155, %154 : vector<8x128xf32>
    %157 = arith.divf %155, %156 : vector<8x128xf32>
    %158 = vector.extract_strided_slice %157 {offsets = [0, 0], sizes = [8, 32], strides = [1, 1]} : vector<8x128xf32> to vector<8x32xf32>
    %159 = vector.extract_strided_slice %157 {offsets = [0, 32], sizes = [8, 32], strides = [1, 1]} : vector<8x128xf32> to vector<8x32xf32>
    %160 = vector.extract_strided_slice %157 {offsets = [0, 64], sizes = [8, 32], strides = [1, 1]} : vector<8x128xf32> to vector<8x32xf32>
    %cst_57 = arith.constant 2.000000e+00 : f32
    %161 = vector.broadcast %cst_57 : f32 to vector<8x32xf32>
    %162 = arith.mulf %161, %160 : vector<8x32xf32>
    %cst_58 = arith.constant 1.000000e+00 : f32
    %163 = vector.broadcast %cst_58 : f32 to vector<8x32xf32>
    %164 = arith.subf %162, %163 : vector<8x32xf32>
    %165 = vector.extract_strided_slice %157 {offsets = [0, 96], sizes = [8, 32], strides = [1, 1]} : vector<8x128xf32> to vector<8x32xf32>
    %166 = arith.mulf %159, %145 : vector<8x32xf32>
    %167 = arith.mulf %158, %164 : vector<8x32xf32>
    %168 = arith.addf %166, %167 : vector<8x32xf32>
    %169 = math.tanh %168 : vector<8x32xf32>
    %170 = arith.mulf %165, %169 : vector<8x32xf32>
    %c48_59 = arith.constant 48 : index
    %c0_60 = arith.constant 0 : index
    %171 = vector.load %arg9[%c48_59, %c0_60] : memref<64x32xf32, #tpu.memory_space<vmem>>, vector<8x32xf32>
    tpu.vector_store %arg9[%c48_59, %c0_60], %170 {strides = array<i32>} : memref<64x32xf32, #tpu.memory_space<vmem>>, vector<8x32xf32>,
    %c56 = arith.constant 56 : index
    %c0_61 = arith.constant 0 : index
    %172 = vector.load %arg8[%c56, %c0_61] : memref<64x128xf32, #tpu.memory_space<vmem>>, vector<8x128xf32>
    %173 = arith.truncf %170 : vector<8x32xf32> to vector<8x32xbf16>
    %cst_62 = arith.constant dense<0.000000e+00> : vector<8x128xf32>
    %174 = tpu.matmul %173, %10, %cst_62 {dimension_numbers = #tpu.dot_dimension_numbers<[1], [0], [0], [1], [0, 0, 1, 1], [], []>} : vector<8x32xbf16>, vector<32x128xbf16>, vector<8x128xf32> -> vector<8x128xf32>
    %175 = arith.addf %172, %174 : vector<8x128xf32>
    %176 = arith.negf %175 : vector<8x128xf32>
    %177 = math.exp %176 : vector<8x128xf32>
    %cst_63 = arith.constant 1.000000e+00 : f32
    %178 = vector.broadcast %cst_63 : f32 to vector<8x128xf32>
    %179 = arith.addf %178, %177 : vector<8x128xf32>
    %180 = arith.divf %178, %179 : vector<8x128xf32>
    %181 = vector.extract_strided_slice %180 {offsets = [0, 0], sizes = [8, 32], strides = [1, 1]} : vector<8x128xf32> to vector<8x32xf32>
    %182 = vector.extract_strided_slice %180 {offsets = [0, 32], sizes = [8, 32], strides = [1, 1]} : vector<8x128xf32> to vector<8x32xf32>
    %183 = vector.extract_strided_slice %180 {offsets = [0, 64], sizes = [8, 32], strides = [1, 1]} : vector<8x128xf32> to vector<8x32xf32>
    %cst_64 = arith.constant 2.000000e+00 : f32
    %184 = vector.broadcast %cst_64 : f32 to vector<8x32xf32>
    %185 = arith.mulf %184, %183 : vector<8x32xf32>
    %cst_65 = arith.constant 1.000000e+00 : f32
    %186 = vector.broadcast %cst_65 : f32 to vector<8x32xf32>
    %187 = arith.subf %185, %186 : vector<8x32xf32>
    %188 = vector.extract_strided_slice %180 {offsets = [0, 96], sizes = [8, 32], strides = [1, 1]} : vector<8x128xf32> to vector<8x32xf32>
    %189 = arith.mulf %182, %168 : vector<8x32xf32>
    %190 = arith.mulf %181, %187 : vector<8x32xf32>
    %191 = arith.addf %189, %190 : vector<8x32xf32>
    %192 = math.tanh %191 : vector<8x32xf32>
    %193 = arith.mulf %188, %192 : vector<8x32xf32>
    %c56_66 = arith.constant 56 : index
    %c0_67 = arith.constant 0 : index
    %194 = vector.load %arg9[%c56_66, %c0_67] : memref<64x32xf32, #tpu.memory_space<vmem>>, vector<8x32xf32>
    tpu.vector_store %arg9[%c56_66, %c0_67], %193 {strides = array<i32>} : memref<64x32xf32, #tpu.memory_space<vmem>>, vector<8x32xf32>,
    %c0_68 = arith.constant 0 : index
    %c0_69 = arith.constant 0 : index
    %195 = vector.load %arg9[%c0_68, %c0_69] : memref<64x32xf32, #tpu.memory_space<vmem>>, vector<64x32xf32>
    %196 = arith.truncf %195 : vector<64x32xf32> to vector<64x32xbf16>
    %c200 = arith.constant 200 : index
    %c0_70 = arith.constant 0 : index
    %197 = vector.load %arg4[%c200, %c0_70] : memref<344x128xbf16, #tpu.memory_space<vmem>>, vector<1x128xbf16>
    %198 = arith.extf %197 : vector<1x128xbf16> to vector<1x128xf32>
    %c336 = arith.constant 336 : index
    %c0_71 = arith.constant 0 : index
    %199 = vector.load %arg4[%c336, %c0_71] : memref<344x128xbf16, #tpu.memory_space<vmem>>, vector<1x128xbf16>
    %200 = arith.extf %199 : vector<1x128xbf16> to vector<1x128xf32>
    %c168 = arith.constant 168 : index
    %c0_72 = arith.constant 0 : index
    %201 = vector.load %arg4[%c168, %c0_72] : memref<344x128xbf16, #tpu.memory_space<vmem>>, vector<32x128xbf16>
    %cst_73 = arith.constant dense<0.000000e+00> : vector<64x128xf32>
    %202 = tpu.matmul %196, %201, %cst_73 {dimension_numbers = #tpu.dot_dimension_numbers<[1], [0], [0], [1], [0, 0, 1, 1], [], []>} : vector<64x32xbf16>, vector<32x128xbf16>, vector<64x128xf32> -> vector<64x128xf32>
    %203 = vector.broadcast %198 : vector<1x128xf32> to vector<64x128xf32>
    %204 = arith.addf %202, %203 : vector<64x128xf32>
    %cst_74 = arith.constant 0.000000e+00 : f32
    %205 = vector.broadcast %cst_74 : f32 to vector<64x128xf32>
    %206 = arith.maximumf %204, %205 : vector<64x128xf32>
    %207 = arith.truncf %206 : vector<64x128xf32> to vector<64x128xbf16>
    %c208 = arith.constant 208 : index
    %c0_75 = arith.constant 0 : index
    %208 = vector.load %arg4[%c208, %c0_75] : memref<344x128xbf16, #tpu.memory_space<vmem>>, vector<128x128xbf16>
    %cst_76 = arith.constant dense<0.000000e+00> : vector<64x128xf32>
    %209 = tpu.matmul %207, %208, %cst_76 {dimension_numbers = #tpu.dot_dimension_numbers<[1], [0], [0], [1], [0, 0, 1, 1], [], []>} : vector<64x128xbf16>, vector<128x128xbf16>, vector<64x128xf32> -> vector<64x128xf32>
    %210 = vector.broadcast %200 : vector<1x128xf32> to vector<64x128xf32>
    %211 = arith.addf %209, %210 : vector<64x128xf32>
    %c0_77 = arith.constant 0 : index
    %c0_78 = arith.constant 0 : index
    %212 = vector.load %arg5[%c0_77, %c0_78] : memref<64x128xf32, #tpu.memory_space<vmem>>, vector<64x128xf32>
    tpu.vector_store %arg5[%c0_77, %c0_78], %211 {strides = array<i32>} : memref<64x128xf32, #tpu.memory_space<vmem>>, vector<64x128xf32>,
    %c0_79 = arith.constant 0 : index
    %c0_80 = arith.constant 0 : index
    %213 = vector.load %arg6[%c0_79, %c0_80] : memref<8x32xf32, #tpu.memory_space<vmem>>, vector<8x32xf32>
    tpu.vector_store %arg6[%c0_79, %c0_80], %193 {strides = array<i32>} : memref<8x32xf32, #tpu.memory_space<vmem>>, vector<8x32xf32>,
    %c0_81 = arith.constant 0 : index
    %c0_82 = arith.constant 0 : index
    %214 = vector.load %arg7[%c0_81, %c0_82] : memref<8x32xf32, #tpu.memory_space<vmem>>, vector<8x32xf32>
    tpu.vector_store %arg7[%c0_81, %c0_82], %191 {strides = array<i32>} : memref<8x32xf32, #tpu.memory_space<vmem>>, vector<8x32xf32>,
    return
  }
  func.func @transform_0(%arg0: i32) -> (i32, i32) {
    %c0_i32 = arith.constant 0 : i32
    %c0_i32_0 = arith.constant 0 : i32
    return %arg0, %c0_i32 : i32, i32
  }
  func.func @transform_1(%arg0: i32) -> (i32, i32) {
    %c0_i32 = arith.constant 0 : i32
    %c0_i32_0 = arith.constant 0 : i32
    return %arg0, %c0_i32 : i32, i32
  }
  func.func @transform_2(%arg0: i32) -> (i32, i32) {
    %c0_i32 = arith.constant 0 : i32
    %c0_i32_0 = arith.constant 0 : i32
    return %arg0, %c0_i32 : i32, i32
  }
  func.func @transform_3(%arg0: i32) -> (i32, i32) {
    %c0_i32 = arith.constant 0 : i32
    %c0_i32_0 = arith.constant 0 : i32
    %c0_i32_1 = arith.constant 0 : i32
    return %c0_i32, %c0_i32_0 : i32, i32
  }
  func.func @transform_4(%arg0: i32) -> (i32, i32) {
    %c0_i32 = arith.constant 0 : i32
    %c0_i32_0 = arith.constant 0 : i32
    return %arg0, %c0_i32 : i32, i32
  }
  func.func @transform_5(%arg0: i32) -> (i32, i32) {
    %c0_i32 = arith.constant 0 : i32
    %c0_i32_0 = arith.constant 0 : i32
    return %arg0, %c0_i32 : i32, i32
  }
  func.func @transform_6(%arg0: i32) -> (i32, i32) {
    %c0_i32 = arith.constant 0 : i32
    %c0_i32_0 = arith.constant 0 : i32
    return %arg0, %c0_i32 : i32, i32
  }
}

</mosaic_0001>

<llo_original>
// kernel: tpu_custom_call.1
$region0: #{tpu_custom_call.1}
  #allocation0 [shape = 'u32[]', space=smem, size = 0x4, offset = 0x4, fixed_abs, tag = 'smem constant byte address 0x4 - core index']
  #allocation1 [shape = 'u32[144,128]{1,0:T(1,128)}', space=vmem, size = 0x12000, scoped, tag = 'internal scratch']
  #allocation2 [shape = 'f32[64,128]{1,0:T(8,128)}', space=vmem, size = 0x8000, scoped, tag = 'scratch operand']
  #allocation3 [shape = 'f32[64,32]{1,0:T(8,128)}', space=vmem, size = 0x8000, scoped, tag = 'scratch operand']
  %s0 = inlined_call_operand.vmem [shape: bf16[64,128], index: 0, kind: input, shape index: {}]
  %s1 = inlined_call_operand.hbm [shape: f32[8,32], index: 1, kind: input, shape index: {}, may-alias: {1,5}]
  %s2 = inlined_call_operand.hbm [shape: f32[8,32], index: 2, kind: input, shape index: {}, may-alias: {2,6}]
  %s3 = inlined_call_operand.hbm [shape: bf16[344,128], index: 3, kind: input, shape index: {}]
  %s4 = inlined_call_operand.hbm [shape: f32[64,128], index: 4, kind: output, shape index: {0}]
  %s5 = inlined_call_operand.hbm [shape: f32[8,32], index: 5, kind: output, shape index: {1}, may-alias: {1,5}]
  %s6 = inlined_call_operand.hbm [shape: f32[8,32], index: 6, kind: output, shape index: {2}, may-alias: {2,6}]
  %7 = xla_tuple %s4, %s5, %s6
  %s8 = sld [smem:[#allocation0]]
  $region54: #{tpu_custom_call.1} parent=0
    _
  %s10 = ssub.s32 1, %s8
  %s11 = scalar_select 0, %s10, %s8
  $region1: #{tpu_custom_call.1} parent=0
    #allocation4 [shape = 'u8[4096]{0}', space=vmem, size = 0x1000, scoped, tag = 'input window, operand 1, single buffered']
    #allocation5 [shape = 's32[1]{0}', space=sflag, size = 0x4, scoped, tag = 'scoped memory for tpu_custom_call.1']
    #allocation6 [shape = 's32[1]{0}', space=sflag, size = 0x4, scoped, tag = 'scoped memory for tpu_custom_call.1']
    #allocation7 [shape = 'u8[4096]{0}', space=vmem, size = 0x1000, scoped, tag = 'input window, operand 2, single buffered']
    #allocation8 [shape = 's32[1]{0}', space=sflag, size = 0x4, scoped, tag = 'scoped memory for tpu_custom_call.1']
    #allocation9 [shape = 'u8[88064]{0}', space=vmem, size = 0x15800, scoped, tag = 'input window, operand 3, single buffered']
    #allocation10 [shape = 'u8[32768]{0}', space=vmem, size = 0x8000, scoped, tag = 'output window, operand 0, single buffered']
    #allocation11 [shape = 'u8[4096]{0}', space=vmem, size = 0x1000, scoped, tag = 'output window, operand 1, single buffered']
    #allocation12 [shape = 's32[1]{0}', space=sflag, size = 0x4, scoped, tag = 'scoped memory for tpu_custom_call.1']
    #allocation13 [shape = 'u8[4096]{0}', space=vmem, size = 0x1000, scoped, tag = 'output window, operand 2, single buffered']
    %12 = vsyncpa [#allocation5], 0
    %13 = vsyncpa [#allocation8], 0
    %14 = vsyncpa [#allocation6], 0
    %15 = vsyncpa [#allocation12], 0
    // Predicated region
    $region2: #{tpu_custom_call.1} parent=1 // pred_check
      _
    $region3: #{tpu_custom_call.1} parent=1 // pred_check_branch
      %17 = sbr.rel (0) target = $region5
    $region4: #{tpu_custom_call.1} parent=1 // pred_region
      _
    $region5: #{tpu_custom_call.1} parent=1 // pred_fallthru
      _
    // Predicated region
    $region6: #{tpu_custom_call.1} parent=1 // pred_check
      _
    $region7: #{tpu_custom_call.1} parent=1 // pred_check_branch
      %19 = sbr.rel (0) target = $region9
    $region8: #{tpu_custom_call.1} parent=1 // pred_region
      %s21 = ssub.s32 128, 128
      %22 = vsyncadd [#allocation5], %s21
      %s24 = sshll.u32 [#allocation4], 4
      %s25 = int_to_ptr.vmem [resolvable:$true] %s24
      %27 = dma.hbm_to_vmem [thread:$0]  %s1, 128, %s25, [#allocation5]
    $region9: #{tpu_custom_call.1} parent=1 // pred_fallthru
      _
    // Predicated region
    $region10: #{tpu_custom_call.1} parent=1 // pred_check
      _
    $region11: #{tpu_custom_call.1} parent=1 // pred_check_branch
      %29 = sbr.rel (0) target = $region13
    $region12: #{tpu_custom_call.1} parent=1 // pred_region
      %s31 = ssub.s32 128, 128
      %32 = vsyncadd [#allocation8], %s31
      %s34 = sshll.u32 [#allocation7], 4
      %s35 = int_to_ptr.vmem [resolvable:$true] %s34
      %37 = dma.hbm_to_vmem [thread:$0]  %s2, 128, %s35, [#allocation8]
    $region13: #{tpu_custom_call.1} parent=1 // pred_fallthru
      _
    // Predicated region
    $region14: #{tpu_custom_call.1} parent=1 // pred_check
      _
    $region15: #{tpu_custom_call.1} parent=1 // pred_check_branch
      %39 = sbr.rel (0) target = $region17
    $region16: #{tpu_custom_call.1} parent=1 // pred_region
      %s41 = ssub.s32 2752, 2752
      %42 = vsyncadd [#allocation8], %s41
      %s43 = sshll.u32 [#allocation9], 4
      %s44 = int_to_ptr.vmem [resolvable:$true] %s43
      %49 = dma.hbm_to_vmem [thread:$0]  %s3, 2752, %s44, [#allocation8], 64, 64, 4
    $region17: #{tpu_custom_call.1} parent=1 // pred_fallthru
      _
    // Predicated region
    $region18: #{tpu_custom_call.1} parent=1 // pred_check
      _
    $region19: #{tpu_custom_call.1} parent=1 // pred_check_branch
      %51 = sbr.rel (0) target = $region21
    $region20: #{tpu_custom_call.1} parent=1 // pred_region
      %52 = dma.done [#allocation5], 128
    $region21: #{tpu_custom_call.1} parent=1 // pred_fallthru
      _
    // Predicated region
    $region22: #{tpu_custom_call.1} parent=1 // pred_check
      _
    $region23: #{tpu_custom_call.1} parent=1 // pred_check_branch
      %54 = sbr.rel (0) target = $region25
    $region24: #{tpu_custom_call.1} parent=1 // pred_region
      %55 = dma.done [#allocation8], 128
    $region25: #{tpu_custom_call.1} parent=1 // pred_fallthru
      _
    // Predicated region
    $region26: #{tpu_custom_call.1} parent=1 // pred_check
      _
    $region27: #{tpu_custom_call.1} parent=1 // pred_check_branch
      %57 = sbr.rel (0) target = $region29
    $region28: #{tpu_custom_call.1} parent=1 // pred_region
      %58 = dma.done [#allocation8], 2752
    $region29: #{tpu_custom_call.1} parent=1 // pred_fallthru
      _
    %v60 = vld [vmem:[#allocation9 + $0x50] sm:$0x1]
    %v61 = vunpack.c.l.bf16 %v60
    %v62 = vld [vmem:[%s0] sm:$0xf]
    %v63 = vld [vmem:[%s0 + $0x4] sm:$0xf]
    %v64 = vld [vmem:[%s0 + $0x8] sm:$0xf]
    %v65 = vld [vmem:[%s0 + $0xc] sm:$0xf]
    %v66 = vld [vmem:[%s0 + $0x10] sm:$0xf]
    %v67 = vld [vmem:[%s0 + $0x14] sm:$0xf]
    %v68 = vld [vmem:[%s0 + $0x18] sm:$0xf]
    %v69 = vld [vmem:[%s0 + $0x1c] sm:$0xf]
    %v70 = vld [vmem:[#allocation9] sm:$0xf]
    %v71 = vld [vmem:[#allocation9 + $0x4] sm:$0xf]
    %v72 = vld [vmem:[#allocation9 + $0x8] sm:$0xf]
    %v73 = vld [vmem:[#allocation9 + $0xc] sm:$0xf]
    %v74 = vld [vmem:[#allocation9 + $0x10] sm:$0xf]
    %v75 = vld [vmem:[#allocation9 + $0x14] sm:$0xf]
    %v76 = vld [vmem:[#allocation9 + $0x18] sm:$0xf]
    %v77 = vld [vmem:[#allocation9 + $0x1c] sm:$0xf]
    %v78 = vld [vmem:[#allocation9 + $0x20] sm:$0xf]
    %v79 = vld [vmem:[#allocation9 + $0x24] sm:$0xf]
    %v80 = vld [vmem:[#allocation9 + $0x28] sm:$0xf]
    %v81 = vld [vmem:[#allocation9 + $0x2c] sm:$0xf]
    %v82 = vld [vmem:[#allocation9 + $0x30] sm:$0xf]
    %v83 = vld [vmem:[#allocation9 + $0x34] sm:$0xf]
    %v84 = vld [vmem:[#allocation9 + $0x38] sm:$0xf]
    %v85 = vld [vmem:[#allocation9 + $0x3c] sm:$0xf]
    %v86 = vlaneseq
    %v87 = vshrl.u32 %v86, 7
    %v88 = vsub.s32 0, %v87
    %v89 = vrot.slane %v61, %v88
    %v98 = vunpack.c.l.b16 %v62
    %v99 = vunpack.c.l.b16 %v63
    %v100 = vunpack.c.l.b16 %v64
    %v101 = vunpack.c.l.b16 %v65
    %v102 = vunpack.c.l.b16 %v66
    %v103 = vunpack.c.l.b16 %v67
    %v104 = vunpack.c.l.b16 %v68
    %v105 = vunpack.c.l.b16 %v69
    %v106 = vpack.c.b16 %v99, %v98
    %v107 = vpack.c.b16 %v101, %v100
    %v108 = vpack.c.b16 %v103, %v102
    %v109 = vpack.c.b16 %v105, %v104
    %v130 = vunpack.c.l.b16 %v70
    %v131 = vunpack.c.l.b16 %v71
    %v132 = vunpack.c.l.b16 %v72
    %v133 = vunpack.c.l.b16 %v73
    %v134 = vunpack.c.l.b16 %v74
    %v135 = vunpack.c.l.b16 %v75
    %v136 = vunpack.c.l.b16 %v76
    %v137 = vunpack.c.l.b16 %v77
    %v138 = vunpack.c.l.b16 %v78
    %v139 = vunpack.c.l.b16 %v79
    %v140 = vunpack.c.l.b16 %v80
    %v141 = vunpack.c.l.b16 %v81
    %v142 = vunpack.c.l.b16 %v82
    %v143 = vunpack.c.l.b16 %v83
    %v144 = vunpack.c.l.b16 %v84
    %v145 = vunpack.c.l.b16 %v85
    %v146 = vpack.c.b16 %v131, %v130
    %v147 = vpack.c.b16 %v133, %v132
    %v148 = vpack.c.b16 %v135, %v134
    %v149 = vpack.c.b16 %v137, %v136
    %v150 = vpack.c.b16 %v139, %v138
    %v151 = vpack.c.b16 %v141, %v140
    %v152 = vpack.c.b16 %v143, %v142
    %v153 = vpack.c.b16 %v145, %v144
    %162 = vmatprep.subr.bf16.mxu0 0
    %163 = vmatpush1.bf16.msra.mxu0 %v153
    %164 = vmatprep.subr.bf16.mxu0 0
    %165 = vmatpush1.bf16.msra.mxu0 %v152
    %166 = vmatprep.subr.bf16.mxu0 0
    %167 = vmatpush1.bf16.msra.mxu0 %v151
    %168 = vmatprep.subr.bf16.mxu0 0
    %169 = vmatpush1.bf16.msra.mxu0 %v150
    %170 = vmatprep.subr.bf16.mxu0 0
    %171 = vmatpush1.bf16.msra.mxu0 %v149
    %172 = vmatprep.subr.bf16.mxu0 0
    %173 = vmatpush1.bf16.msra.mxu0 %v148
    %174 = vmatprep.subr.bf16.mxu0 0
    %175 = vmatpush1.bf16.msra.mxu0 %v147
    %176 = vmatprep.subr.bf16.mxu0 0
    %177 = vmatpush1.bf16.msra.mxu0 %v146
    %178 = vmatprep.subr.bf16.mxu0 0
    %179 = vmatpush2.bf16.msra.mxu0 0
    %180 = vmatprep.subr.bf16.mxu0 0
    %181 = vmatpush2.bf16.msra.mxu0 0
    %182 = vmatprep.subr.bf16.mxu0 0
    %183 = vmatpush2.bf16.msra.mxu0 0
    %184 = vmatprep.subr.bf16.mxu0 0
    %185 = vmatpush2.bf16.msra.mxu0 0
    %186 = vmatprep.subr.bf16.mxu0 0
    %187 = vmatpush2.bf16.msra.mxu0 0
    %188 = vmatprep.subr.bf16.mxu0 0
    %189 = vmatpush2.bf16.msra.mxu0 0
    %190 = vmatprep.subr.bf16.mxu0 0
    %191 = vmatpush2.bf16.msra.mxu0 0
    %192 = vmatprep.subr.bf16.mxu0 0
    %193 = vmatpush2.bf16.msra.mxu0 0
    %194 = vmatprep.mubr.bf16.mxu0 0
    %195 = vmatmul.mubr.bf16.gmra.mxu0 %v106
    %v196 = vpop.f32.mrf.mxu0
    %v197 = vadd.f32 %v89, %v196
    %v198 = vpop.f32.mrf.mxu0
    %v199 = vpop.f32.mrf.mxu0
    %v200 = vadd.f32 %v89, %v199
    %v201 = vpop.f32.mrf.mxu0
    %202 = vmatprep.mubr.bf16.mxu0 0
    %203 = vmatmul.mubr.bf16.gmra.mxu0 %v107
    %v204 = vpop.f32.mrf.mxu0
    %v205 = vadd.f32 %v89, %v204
    %v206 = vpop.f32.mrf.mxu0
    %v207 = vpop.f32.mrf.mxu0
    %v208 = vadd.f32 %v89, %v207
    %v209 = vpop.f32.mrf.mxu0
    %210 = vmatprep.mubr.bf16.mxu0 0
    %211 = vmatmul.mubr.bf16.gmra.mxu0 %v108
    %v212 = vpop.f32.mrf.mxu0
    %v213 = vadd.f32 %v89, %v212
    %v214 = vpop.f32.mrf.mxu0
    %v215 = vpop.f32.mrf.mxu0
    %v216 = vadd.f32 %v89, %v215
    %v217 = vpop.f32.mrf.mxu0
    %218 = vmatprep.mubr.bf16.mxu0 0
    %219 = vmatmul.mubr.bf16.gmra.mxu0 %v109
    %v220 = vpop.f32.mrf.mxu0
    %v221 = vadd.f32 %v89, %v220
    %v222 = vpop.f32.mrf.mxu0
    %v223 = vpop.f32.mrf.mxu0
    %v224 = vadd.f32 %v89, %v223
    %v225 = vpop.f32.mrf.mxu0
    %226 = vdwg.mxu0
    %227 = vst [vmem:[#allocation2] sm:$0xff] %v197
    %228 = vst [vmem:[#allocation2 + $0x8] sm:$0xff] %v200
    %229 = vst [vmem:[#allocation2 + $0x10] sm:$0xff] %v205
    %230 = vst [vmem:[#allocation2 + $0x18] sm:$0xff] %v208
    %231 = vst [vmem:[#allocation2 + $0x20] sm:$0xff] %v213
    %232 = vst [vmem:[#allocation2 + $0x28] sm:$0xff] %v216
    %233 = vst [vmem:[#allocation2 + $0x30] sm:$0xff] %v221
    %234 = vst [vmem:[#allocation2 + $0x38] sm:$0xff] %v224
    %v235 = vld [vmem:[#allocation4] sm:$0xff]
    %v236 = vld [vmem:[#allocation7] sm:$0xff]
    %v237 = vld [vmem:[#allocation9 + $0x40] sm:$0xf]
    %v238 = vld [vmem:[#allocation9 + $0x44] sm:$0xf]
    %v239 = vld [vmem:[#allocation9 + $0x48] sm:$0xf]
    %v240 = vld [vmem:[#allocation9 + $0x4c] sm:$0xf]
    %v241 = vld [vmem:[#allocation2] sm:$0xff]
    %v242 = vpack.c.bf16 %v235, %v235
    %v247 = vunpack.c.l.b16 %v237
    %v248 = vunpack.c.l.b16 %v238
    %v249 = vunpack.c.l.b16 %v239
    %v250 = vunpack.c.l.b16 %v240
    %v251 = vpack.c.b16 %v248, %v247
    %v252 = vpack.c.b16 %v250, %v249
    %vm255 = vcmask 261120
    %v257 = vsel %vm255, %v242, 0
    %259 = vmatprep.subr.bf16.mxu0 0
    %260 = vmatpush1.bf16.msra.mxu0 0
    %261 = vmatprep.subr.bf16.mxu0 0
    %262 = vmatpush1.bf16.msra.mxu0 0
    %263 = vmatprep.subr.bf16.mxu0 0
    %264 = vmatpush1.bf16.msra.mxu0 0
    %265 = vmatprep.subr.bf16.mxu0 0
    %266 = vmatpush1.bf16.msra.mxu0 0
    %267 = vmatprep.subr.bf16.mxu0 0
    %268 = vmatpush1.bf16.msra.mxu0 0
    %269 = vmatprep.subr.bf16.mxu0 0
    %270 = vmatpush1.bf16.msra.mxu0 0
    %271 = vmatprep.subr.bf16.mxu0 0
    %272 = vmatpush1.bf16.msra.mxu0 %v252
    %273 = vmatprep.subr.bf16.mxu0 0
    %274 = vmatpush1.bf16.msra.mxu0 %v251
    %275 = vmatprep.subr.bf16.mxu0 0
    %276 = vmatpush2.bf16.msra.mxu0 0
    %277 = vmatprep.subr.bf16.mxu0 0
    %278 = vmatpush2.bf16.msra.mxu0 0
    %279 = vmatprep.subr.bf16.mxu0 0
    %280 = vmatpush2.bf16.msra.mxu0 0
    %281 = vmatprep.subr.bf16.mxu0 0
    %282 = vmatpush2.bf16.msra.mxu0 0
    %283 = vmatprep.subr.bf16.mxu0 0
    %284 = vmatpush2.bf16.msra.mxu0 0
    %285 = vmatprep.subr.bf16.mxu0 0
    %286 = vmatpush2.bf16.msra.mxu0 0
    %287 = vmatprep.subr.bf16.mxu0 0
    %288 = vmatpush2.bf16.msra.mxu0 0
    %289 = vmatprep.subr.bf16.mxu0 0
    %290 = vmatpush2.bf16.msra.mxu0 0
    %291 = vmatprep.mubr.bf16.mxu0 0
    %292 = vmatmul.mubr.bf16.gmra.mxu0 %v257
    %v293 = vpop.f32.mrf.mxu0
    %v294 = vadd.f32 0.0, %v293
    %v295 = vpop.f32.mrf.mxu0
    %v296 = vpop.f32.mrf.mxu0
    %v297 = vpop.f32.mrf.mxu0
    %298 = vdwg.mxu0
    %v299 = vadd.f32 %v241, %v294
    %v300 = vxor.u32 %v299, 2147483648
    %v301 = vmul.f32 %v300, 1.442695
    %v302 = vpow.pop %v301
    %v303 = vadd.f32 %v302, 1.0
    %v304 = vrcp.pop %v303
    %v305 = vmul.f32 1.0, %v304
    %v306 = vmul.f32 %v305, 2.0
    %v307 = vsub.f32 %v306, 1.0
    %309 = vrot.lane.b32.xlu0 %v236, 32
    %v310 = vpop.permute.xlu0 %309
    %v312 = vmul.f32 %v305, %v310
    %314 = vrot.lane.b32.xlu0 %v307, 64
    %v315 = vpop.permute.xlu0 %314
    %v317 = vmul.f32 %v305, %v315
    %319 = vrot.lane.b32.xlu0 %v317, 32
    %v320 = vpop.permute.xlu0 %319
    %v322 = vadd.f32 %v312, %v320
    %v323 = vtanh.pop %v322
    %325 = vrot.lane.b32.xlu0 %v323, 64
    %v326 = vpop.permute.xlu0 %325
    %v328 = vmul.f32 %v305, %v326
    %330 = vrot.lane.b32.xlu0 %v328, 32
    %v331 = vpop.permute.xlu0 %330
    %333 = vst.msk [vmem:[#allocation3] sm:$0xff] %vm255, %v331
    %v334 = vld [vmem:[#allocation2 + $0x8] sm:$0xff]
    %v335 = vpack.c.bf16 %v328, %v328
    %337 = vrot.lane.b32.xlu0 %v335, 32
    %v338 = vpop.permute.xlu0 %337
    %v340 = vsel %vm255, %v338, 0
    %342 = vmatprep.subr.bf16.mxu0 0
    %343 = vmatpush1.bf16.msra.mxu0 0
    %344 = vmatprep.subr.bf16.mxu0 0
    %345 = vmatpush1.bf16.msra.mxu0 0
    %346 = vmatprep.subr.bf16.mxu0 0
    %347 = vmatpush1.bf16.msra.mxu0 0
    %348 = vmatprep.subr.bf16.mxu0 0
    %349 = vmatpush1.bf16.msra.mxu0 0
    %350 = vmatprep.subr.bf16.mxu0 0
    %351 = vmatpush1.bf16.msra.mxu0 0
    %352 = vmatprep.subr.bf16.mxu0 0
    %353 = vmatpush1.bf16.msra.mxu0 0
    %354 = vmatprep.subr.bf16.mxu0 0
    %355 = vmatpush1.bf16.msra.mxu0 %v252
    %356 = vmatprep.subr.bf16.mxu0 0
    %357 = vmatpush1.bf16.msra.mxu0 %v251
    %358 = vmatprep.subr.bf16.mxu0 0
    %359 = vmatpush2.bf16.msra.mxu0 0
    %360 = vmatprep.subr.bf16.mxu0 0
    %361 = vmatpush2.bf16.msra.mxu0 0
    %362 = vmatprep.subr.bf16.mxu0 0
    %363 = vmatpush2.bf16.msra.mxu0 0
    %364 = vmatprep.subr.bf16.mxu0 0
    %365 = vmatpush2.bf16.msra.mxu0 0
    %366 = vmatprep.subr.bf16.mxu0 0
    %367 = vmatpush2.bf16.msra.mxu0 0
    %368 = vmatprep.subr.bf16.mxu0 0
    %369 = vmatpush2.bf16.msra.mxu0 0
    %370 = vmatprep.subr.bf16.mxu0 0
    %371 = vmatpush2.bf16.msra.mxu0 0
    %372 = vmatprep.subr.bf16.mxu0 0
    %373 = vmatpush2.bf16.msra.mxu0 0
    %374 = vmatprep.mubr.bf16.mxu0 0
    %375 = vmatmul.mubr.bf16.gmra.mxu0 %v340
    %v376 = vpop.f32.mrf.mxu0
    %v377 = vadd.f32 0.0, %v376
    %v378 = vpop.f32.mrf.mxu0
    %v379 = vpop.f32.mrf.mxu0
    %v380 = vpop.f32.mrf.mxu0
    %381 = vdwg.mxu0
    %v382 = vadd.f32 %v334, %v377
    %v383 = vxor.u32 %v382, 2147483648
    %v384 = vmul.f32 %v383, 1.442695
    %v385 = vpow.pop %v384
    %v386 = vadd.f32 %v385, 1.0
    %v387 = vrcp.pop %v386
    %v388 = vmul.f32 1.0, %v387
    %v389 = vmul.f32 %v388, 2.0
    %v390 = vsub.f32 %v389, 1.0
    %v391 = vmul.f32 %v388, %v322
    %393 = vrot.lane.b32.xlu0 %v390, 64
    %v394 = vpop.permute.xlu0 %393
    %v396 = vmul.f32 %v388, %v394
    %398 = vrot.lane.b32.xlu0 %v396, 32
    %v399 = vpop.permute.xlu0 %398
    %v401 = vadd.f32 %v391, %v399
    %v402 = vtanh.pop %v401
    %404 = vrot.lane.b32.xlu0 %v402, 64
    %v405 = vpop.permute.xlu0 %404
    %v407 = vmul.f32 %v388, %v405
    %409 = vrot.lane.b32.xlu0 %v407, 32
    %v410 = vpop.permute.xlu0 %409
    %412 = vst.msk [vmem:[#allocation3 + $0x8] sm:$0xff] %vm255, %v410
    %v413 = vld [vmem:[#allocation2 + $0x10] sm:$0xff]
    %v414 = vpack.c.bf16 %v407, %v407
    %416 = vrot.lane.b32.xlu0 %v414, 32
    %v417 = vpop.permute.xlu0 %416
    %v419 = vsel %vm255, %v417, 0
    %421 = vmatprep.subr.bf16.mxu0 0
    %422 = vmatpush1.bf16.msra.mxu0 0
    %423 = vmatprep.subr.bf16.mxu0 0
    %424 = vmatpush1.bf16.msra.mxu0 0
    %425 = vmatprep.subr.bf16.mxu0 0
    %426 = vmatpush1.bf16.msra.mxu0 0
    %427 = vmatprep.subr.bf16.mxu0 0
    %428 = vmatpush1.bf16.msra.mxu0 0
    %429 = vmatprep.subr.bf16.mxu0 0
    %430 = vmatpush1.bf16.msra.mxu0 0
    %431 = vmatprep.subr.bf16.mxu0 0
    %432 = vmatpush1.bf16.msra.mxu0 0
    %433 = vmatprep.subr.bf16.mxu0 0
    %434 = vmatpush1.bf16.msra.mxu0 %v252
    %435 = vmatprep.subr.bf16.mxu0 0
    %436 = vmatpush1.bf16.msra.mxu0 %v251
    %437 = vmatprep.subr.bf16.mxu0 0
    %438 = vmatpush2.bf16.msra.mxu0 0
    %439 = vmatprep.subr.bf16.mxu0 0
    %440 = vmatpush2.bf16.msra.mxu0 0
    %441 = vmatprep.subr.bf16.mxu0 0
    %442 = vmatpush2.bf16.msra.mxu0 0
    %443 = vmatprep.subr.bf16.mxu0 0
    %444 = vmatpush2.bf16.msra.mxu0 0
    %445 = vmatprep.subr.bf16.mxu0 0
    %446 = vmatpush2.bf16.msra.mxu0 0
    %447 = vmatprep.subr.bf16.mxu0 0
    %448 = vmatpush2.bf16.msra.mxu0 0
    %449 = vmatprep.subr.bf16.mxu0 0
    %450 = vmatpush2.bf16.msra.mxu0 0
    %451 = vmatprep.subr.bf16.mxu0 0
    %452 = vmatpush2.bf16.msra.mxu0 0
    %453 = vmatprep.mubr.bf16.mxu0 0
    %454 = vmatmul.mubr.bf16.gmra.mxu0 %v419
    %v455 = vpop.f32.mrf.mxu0
    %v456 = vadd.f32 0.0, %v455
    %v457 = vpop.f32.mrf.mxu0
    %v458 = vpop.f32.mrf.mxu0
    %v459 = vpop.f32.mrf.mxu0
    %460 = vdwg.mxu0
    %v461 = vadd.f32 %v413, %v456
    %v462 = vxor.u32 %v461, 2147483648
    %v463 = vmul.f32 %v462, 1.442695
    %v464 = vpow.pop %v463
    %v465 = vadd.f32 %v464, 1.0
    %v466 = vrcp.pop %v465
    %v467 = vmul.f32 1.0, %v466
    %v468 = vmul.f32 %v467, 2.0
    %v469 = vsub.f32 %v468, 1.0
    %v470 = vmul.f32 %v467, %v401
    %472 = vrot.lane.b32.xlu0 %v469, 64
    %v473 = vpop.permute.xlu0 %472
    %v475 = vmul.f32 %v467, %v473
    %477 = vrot.lane.b32.xlu0 %v475, 32
    %v478 = vpop.permute.xlu0 %477
    %v480 = vadd.f32 %v470, %v478
    %v481 = vtanh.pop %v480
    %483 = vrot.lane.b32.xlu0 %v481, 64
    %v484 = vpop.permute.xlu0 %483
    %v486 = vmul.f32 %v467, %v484
    %488 = vrot.lane.b32.xlu0 %v486, 32
    %v489 = vpop.permute.xlu0 %488
    %491 = vst.msk [vmem:[#allocation3 + $0x10] sm:$0xff] %vm255, %v489
    %v492 = vld [vmem:[#allocation2 + $0x18] sm:$0xff]
    %v493 = vpack.c.bf16 %v486, %v486
    %495 = vrot.lane.b32.xlu0 %v493, 32
    %v496 = vpop.permute.xlu0 %495
    %v498 = vsel %vm255, %v496, 0
    %500 = vmatprep.subr.bf16.mxu0 0
    %501 = vmatpush1.bf16.msra.mxu0 0
    %502 = vmatprep.subr.bf16.mxu0 0
    %503 = vmatpush1.bf16.msra.mxu0 0
    %504 = vmatprep.subr.bf16.mxu0 0
    %505 = vmatpush1.bf16.msra.mxu0 0
    %506 = vmatprep.subr.bf16.mxu0 0
    %507 = vmatpush1.bf16.msra.mxu0 0
    %508 = vmatprep.subr.bf16.mxu0 0
    %509 = vmatpush1.bf16.msra.mxu0 0
    %510 = vmatprep.subr.bf16.mxu0 0
    %511 = vmatpush1.bf16.msra.mxu0 0
    %512 = vmatprep.subr.bf16.mxu0 0
    %513 = vmatpush1.bf16.msra.mxu0 %v252
    %514 = vmatprep.subr.bf16.mxu0 0
    %515 = vmatpush1.bf16.msra.mxu0 %v251
    %516 = vmatprep.subr.bf16.mxu0 0
    %517 = vmatpush2.bf16.msra.mxu0 0
    %518 = vmatprep.subr.bf16.mxu0 0
    %519 = vmatpush2.bf16.msra.mxu0 0
    %520 = vmatprep.subr.bf16.mxu0 0
    %521 = vmatpush2.bf16.msra.mxu0 0
    %522 = vmatprep.subr.bf16.mxu0 0
    %523 = vmatpush2.bf16.msra.mxu0 0
    %524 = vmatprep.subr.bf16.mxu0 0
    %525 = vmatpush2.bf16.msra.mxu0 0
    %526 = vmatprep.subr.bf16.mxu0 0
    %527 = vmatpush2.bf16.msra.mxu0 0
    %528 = vmatprep.subr.bf16.mxu0 0
    %529 = vmatpush2.bf16.msra.mxu0 0
    %530 = vmatprep.subr.bf16.mxu0 0
    %531 = vmatpush2.bf16.msra.mxu0 0
    %532 = vmatprep.mubr.bf16.mxu0 0
    %533 = vmatmul.mubr.bf16.gmra.mxu0 %v498
    %v534 = vpop.f32.mrf.mxu0
    %v535 = vadd.f32 0.0, %v534
    %v536 = vpop.f32.mrf.mxu0
    %v537 = vpop.f32.mrf.mxu0
    %v538 = vpop.f32.mrf.mxu0
    %539 = vdwg.mxu0
    %v540 = vadd.f32 %v492, %v535
    %v541 = vxor.u32 %v540, 2147483648
    %v542 = vmul.f32 %v541, 1.442695
    %v543 = vpow.pop %v542
    %v544 = vadd.f32 %v543, 1.0
    %v545 = vrcp.pop %v544
    %v546 = vmul.f32 1.0, %v545
    %v547 = vmul.f32 %v546, 2.0
    %v548 = vsub.f32 %v547, 1.0
    %v549 = vmul.f32 %v546, %v480
    %551 = vrot.lane.b32.xlu0 %v548, 64
    %v552 = vpop.permute.xlu0 %551
    %v554 = vmul.f32 %v546, %v552
    %556 = vrot.lane.b32.xlu0 %v554, 32
    %v557 = vpop.permute.xlu0 %556
    %v559 = vadd.f32 %v549, %v557
    %v560 = vtanh.pop %v559
    %562 = vrot.lane.b32.xlu0 %v560, 64
    %v563 = vpop.permute.xlu0 %562
    %v565 = vmul.f32 %v546, %v563
    %567 = vrot.lane.b32.xlu0 %v565, 32
    %v568 = vpop.permute.xlu0 %567
    %570 = vst.msk [vmem:[#allocation3 + $0x18] sm:$0xff] %vm255, %v568
    %v571 = vld [vmem:[#allocation2 + $0x20] sm:$0xff]
    %v572 = vpack.c.bf16 %v565, %v565
    %574 = vrot.lane.b32.xlu0 %v572, 32
    %v575 = vpop.permute.xlu0 %574
    %v577 = vsel %vm255, %v575, 0
    %579 = vmatprep.subr.bf16.mxu0 0
    %580 = vmatpush1.bf16.msra.mxu0 0
    %581 = vmatprep.subr.bf16.mxu0 0
    %582 = vmatpush1.bf16.msra.mxu0 0
    %583 = vmatprep.subr.bf16.mxu0 0
    %584 = vmatpush1.bf16.msra.mxu0 0
    %585 = vmatprep.subr.bf16.mxu0 0
    %586 = vmatpush1.bf16.msra.mxu0 0
    %587 = vmatprep.subr.bf16.mxu0 0
    %588 = vmatpush1.bf16.msra.mxu0 0
    %589 = vmatprep.subr.bf16.mxu0 0
    %590 = vmatpush1.bf16.msra.mxu0 0
    %591 = vmatprep.subr.bf16.mxu0 0
    %592 = vmatpush1.bf16.msra.mxu0 %v252
    %593 = vmatprep.subr.bf16.mxu0 0
    %594 = vmatpush1.bf16.msra.mxu0 %v251
    %595 = vmatprep.subr.bf16.mxu0 0
    %596 = vmatpush2.bf16.msra.mxu0 0
    %597 = vmatprep.subr.bf16.mxu0 0
    %598 = vmatpush2.bf16.msra.mxu0 0
    %599 = vmatprep.subr.bf16.mxu0 0
    %600 = vmatpush2.bf16.msra.mxu0 0
    %601 = vmatprep.subr.bf16.mxu0 0
    %602 = vmatpush2.bf16.msra.mxu0 0
    %603 = vmatprep.subr.bf16.mxu0 0
    %604 = vmatpush2.bf16.msra.mxu0 0
    %605 = vmatprep.subr.bf16.mxu0 0
    %606 = vmatpush2.bf16.msra.mxu0 0
    %607 = vmatprep.subr.bf16.mxu0 0
    %608 = vmatpush2.bf16.msra.mxu0 0
    %609 = vmatprep.subr.bf16.mxu0 0
    %610 = vmatpush2.bf16.msra.mxu0 0
    %611 = vmatprep.mubr.bf16.mxu0 0
    %612 = vmatmul.mubr.bf16.gmra.mxu0 %v577
    %v613 = vpop.f32.mrf.mxu0
    %v614 = vadd.f32 0.0, %v613
    %v615 = vpop.f32.mrf.mxu0
    %v616 = vpop.f32.mrf.mxu0
    %v617 = vpop.f32.mrf.mxu0
    %618 = vdwg.mxu0
    %v619 = vadd.f32 %v571, %v614
    %v620 = vxor.u32 %v619, 2147483648
    %v621 = vmul.f32 %v620, 1.442695
    %v622 = vpow.pop %v621
    %v623 = vadd.f32 %v622, 1.0
    %v624 = vrcp.pop %v623
    %v625 = vmul.f32 1.0, %v624
    %v626 = vmul.f32 %v625, 2.0
    %v627 = vsub.f32 %v626, 1.0
    %v628 = vmul.f32 %v625, %v559
    %630 = vrot.lane.b32.xlu0 %v627, 64
    %v631 = vpop.permute.xlu0 %630
    %v633 = vmul.f32 %v625, %v631
    %635 = vrot.lane.b32.xlu0 %v633, 32
    %v636 = vpop.permute.xlu0 %635
    %v638 = vadd.f32 %v628, %v636
    %v639 = vtanh.pop %v638
    %641 = vrot.lane.b32.xlu0 %v639, 64
    %v642 = vpop.permute.xlu0 %641
    %v644 = vmul.f32 %v625, %v642
    %646 = vrot.lane.b32.xlu0 %v644, 32
    %v647 = vpop.permute.xlu0 %646
    %649 = vst.msk [vmem:[#allocation3 + $0x20] sm:$0xff] %vm255, %v647
    %v650 = vld [vmem:[#allocation2 + $0x28] sm:$0xff]
    %v651 = vpack.c.bf16 %v644, %v644
    %653 = vrot.lane.b32.xlu0 %v651, 32
    %v654 = vpop.permute.xlu0 %653
    %v656 = vsel %vm255, %v654, 0
    %658 = vmatprep.subr.bf16.mxu0 0
    %659 = vmatpush1.bf16.msra.mxu0 0
    %660 = vmatprep.subr.bf16.mxu0 0
    %661 = vmatpush1.bf16.msra.mxu0 0
    %662 = vmatprep.subr.bf16.mxu0 0
    %663 = vmatpush1.bf16.msra.mxu0 0
    %664 = vmatprep.subr.bf16.mxu0 0
    %665 = vmatpush1.bf16.msra.mxu0 0
    %666 = vmatprep.subr.bf16.mxu0 0
    %667 = vmatpush1.bf16.msra.mxu0 0
    %668 = vmatprep.subr.bf16.mxu0 0
    %669 = vmatpush1.bf16.msra.mxu0 0
    %670 = vmatprep.subr.bf16.mxu0 0
    %671 = vmatpush1.bf16.msra.mxu0 %v252
    %672 = vmatprep.subr.bf16.mxu0 0
    %673 = vmatpush1.bf16.msra.mxu0 %v251
    %674 = vmatprep.subr.bf16.mxu0 0
    %675 = vmatpush2.bf16.msra.mxu0 0
    %676 = vmatprep.subr.bf16.mxu0 0
    %677 = vmatpush2.bf16.msra.mxu0 0
    %678 = vmatprep.subr.bf16.mxu0 0
    %679 = vmatpush2.bf16.msra.mxu0 0
    %680 = vmatprep.subr.bf16.mxu0 0
    %681 = vmatpush2.bf16.msra.mxu0 0
    %682 = vmatprep.subr.bf16.mxu0 0
    %683 = vmatpush2.bf16.msra.mxu0 0
    %684 = vmatprep.subr.bf16.mxu0 0
    %685 = vmatpush2.bf16.msra.mxu0 0
    %686 = vmatprep.subr.bf16.mxu0 0
    %687 = vmatpush2.bf16.msra.mxu0 0
    %688 = vmatprep.subr.bf16.mxu0 0
    %689 = vmatpush2.bf16.msra.mxu0 0
    %690 = vmatprep.mubr.bf16.mxu0 0
    %691 = vmatmul.mubr.bf16.gmra.mxu0 %v656
    %v692 = vpop.f32.mrf.mxu0
    %v693 = vadd.f32 0.0, %v692
    %v694 = vpop.f32.mrf.mxu0
    %v695 = vpop.f32.mrf.mxu0
    %v696 = vpop.f32.mrf.mxu0
    %697 = vdwg.mxu0
    %v698 = vadd.f32 %v650, %v693
    %v699 = vxor.u32 %v698, 2147483648
    %v700 = vmul.f32 %v699, 1.442695
    %v701 = vpow.pop %v700
    %v702 = vadd.f32 %v701, 1.0
    %v703 = vrcp.pop %v702
    %v704 = vmul.f32 1.0, %v703
    %v705 = vmul.f32 %v704, 2.0
    %v706 = vsub.f32 %v705, 1.0
    %v707 = vmul.f32 %v704, %v638
    %709 = vrot.lane.b32.xlu0 %v706, 64
    %v710 = vpop.permute.xlu0 %709
    %v712 = vmul.f32 %v704, %v710
    %714 = vrot.lane.b32.xlu0 %v712, 32
    %v715 = vpop.permute.xlu0 %714
    %v717 = vadd.f32 %v707, %v715
    %v718 = vtanh.pop %v717
    %720 = vrot.lane.b32.xlu0 %v718, 64
    %v721 = vpop.permute.xlu0 %720
    %v723 = vmul.f32 %v704, %v721
    %725 = vrot.lane.b32.xlu0 %v723, 32
    %v726 = vpop.permute.xlu0 %725
    %728 = vst.msk [vmem:[#allocation3 + $0x28] sm:$0xff] %vm255, %v726
    %v729 = vld [vmem:[#allocation2 + $0x30] sm:$0xff]
    %v730 = vpack.c.bf16 %v723, %v723
    %732 = vrot.lane.b32.xlu0 %v730, 32
    %v733 = vpop.permute.xlu0 %732
    %v735 = vsel %vm255, %v733, 0
    %737 = vmatprep.subr.bf16.mxu0 0
    %738 = vmatpush1.bf16.msra.mxu0 0
    %739 = vmatprep.subr.bf16.mxu0 0
    %740 = vmatpush1.bf16.msra.mxu0 0
    %741 = vmatprep.subr.bf16.mxu0 0
    %742 = vmatpush1.bf16.msra.mxu0 0
    %743 = vmatprep.subr.bf16.mxu0 0
    %744 = vmatpush1.bf16.msra.mxu0 0
    %745 = vmatprep.subr.bf16.mxu0 0
    %746 = vmatpush1.bf16.msra.mxu0 0
    %747 = vmatprep.subr.bf16.mxu0 0
    %748 = vmatpush1.bf16.msra.mxu0 0
    %749 = vmatprep.subr.bf16.mxu0 0
    %750 = vmatpush1.bf16.msra.mxu0 %v252
    %751 = vmatprep.subr.bf16.mxu0 0
    %752 = vmatpush1.bf16.msra.mxu0 %v251
    %753 = vmatprep.subr.bf16.mxu0 0
    %754 = vmatpush2.bf16.msra.mxu0 0
    %755 = vmatprep.subr.bf16.mxu0 0
    %756 = vmatpush2.bf16.msra.mxu0 0
    %757 = vmatprep.subr.bf16.mxu0 0
    %758 = vmatpush2.bf16.msra.mxu0 0
    %759 = vmatprep.subr.bf16.mxu0 0
    %760 = vmatpush2.bf16.msra.mxu0 0
    %761 = vmatprep.subr.bf16.mxu0 0
    %762 = vmatpush2.bf16.msra.mxu0 0
    %763 = vmatprep.subr.bf16.mxu0 0
    %764 = vmatpush2.bf16.msra.mxu0 0
    %765 = vmatprep.subr.bf16.mxu0 0
    %766 = vmatpush2.bf16.msra.mxu0 0
    %767 = vmatprep.subr.bf16.mxu0 0
    %768 = vmatpush2.bf16.msra.mxu0 0
    %769 = vmatprep.mubr.bf16.mxu0 0
    %770 = vmatmul.mubr.bf16.gmra.mxu0 %v735
    %v771 = vpop.f32.mrf.mxu0
    %v772 = vadd.f32 0.0, %v771
    %v773 = vpop.f32.mrf.mxu0
    %v774 = vpop.f32.mrf.mxu0
    %v775 = vpop.f32.mrf.mxu0
    %776 = vdwg.mxu0
    %v777 = vadd.f32 %v729, %v772
    %v778 = vxor.u32 %v777, 2147483648
    %v779 = vmul.f32 %v778, 1.442695
    %v780 = vpow.pop %v779
    %v781 = vadd.f32 %v780, 1.0
    %v782 = vrcp.pop %v781
    %v783 = vmul.f32 1.0, %v782
    %v784 = vmul.f32 %v783, 2.0
    %v785 = vsub.f32 %v784, 1.0
    %v786 = vmul.f32 %v783, %v717
    %788 = vrot.lane.b32.xlu0 %v785, 64
    %v789 = vpop.permute.xlu0 %788
    %v791 = vmul.f32 %v783, %v789
    %793 = vrot.lane.b32.xlu0 %v791, 32
    %v794 = vpop.permute.xlu0 %793
    %v796 = vadd.f32 %v786, %v794
    %v797 = vtanh.pop %v796
    %799 = vrot.lane.b32.xlu0 %v797, 64
    %v800 = vpop.permute.xlu0 %799
    %v802 = vmul.f32 %v783, %v800
    %804 = vrot.lane.b32.xlu0 %v802, 32
    %v805 = vpop.permute.xlu0 %804
    %807 = vst.msk [vmem:[#allocation3 + $0x30] sm:$0xff] %vm255, %v805
    %v808 = vld [vmem:[#allocation2 + $0x38] sm:$0xff]
    %v809 = vpack.c.bf16 %v802, %v802
    %811 = vrot.lane.b32.xlu0 %v809, 32
    %v812 = vpop.permute.xlu0 %811
    %v814 = vsel %vm255, %v812, 0
    %816 = vmatprep.subr.bf16.mxu0 0
    %817 = vmatpush1.bf16.msra.mxu0 0
    %818 = vmatprep.subr.bf16.mxu0 0
    %819 = vmatpush1.bf16.msra.mxu0 0
    %820 = vmatprep.subr.bf16.mxu0 0
    %821 = vmatpush1.bf16.msra.mxu0 0
    %822 = vmatprep.subr.bf16.mxu0 0
    %823 = vmatpush1.bf16.msra.mxu0 0
    %824 = vmatprep.subr.bf16.mxu0 0
    %825 = vmatpush1.bf16.msra.mxu0 0
    %826 = vmatprep.subr.bf16.mxu0 0
    %827 = vmatpush1.bf16.msra.mxu0 0
    %828 = vmatprep.subr.bf16.mxu0 0
    %829 = vmatpush1.bf16.msra.mxu0 %v252
    %830 = vmatprep.subr.bf16.mxu0 0
    %831 = vmatpush1.bf16.msra.mxu0 %v251
    %832 = vmatprep.subr.bf16.mxu0 0
    %833 = vmatpush2.bf16.msra.mxu0 0
    %834 = vmatprep.subr.bf16.mxu0 0
    %835 = vmatpush2.bf16.msra.mxu0 0
    %836 = vmatprep.subr.bf16.mxu0 0
    %837 = vmatpush2.bf16.msra.mxu0 0
    %838 = vmatprep.subr.bf16.mxu0 0
    %839 = vmatpush2.bf16.msra.mxu0 0
    %840 = vmatprep.subr.bf16.mxu0 0
    %841 = vmatpush2.bf16.msra.mxu0 0
    %842 = vmatprep.subr.bf16.mxu0 0
    %843 = vmatpush2.bf16.msra.mxu0 0
    %844 = vmatprep.subr.bf16.mxu0 0
    %845 = vmatpush2.bf16.msra.mxu0 0
    %846 = vmatprep.subr.bf16.mxu0 0
    %847 = vmatpush2.bf16.msra.mxu0 0
    %848 = vmatprep.mubr.bf16.mxu0 0
    %849 = vmatmul.mubr.bf16.gmra.mxu0 %v814
    %v850 = vpop.f32.mrf.mxu0
    %v851 = vadd.f32 0.0, %v850
    %v852 = vpop.f32.mrf.mxu0
    %v853 = vpop.f32.mrf.mxu0
    %v854 = vpop.f32.mrf.mxu0
    %855 = vdwg.mxu0
    %v856 = vadd.f32 %v808, %v851
    %v857 = vxor.u32 %v856, 2147483648
    %v858 = vmul.f32 %v857, 1.442695
    %v859 = vpow.pop %v858
    %v860 = vadd.f32 %v859, 1.0
    %v861 = vrcp.pop %v860
    %v862 = vmul.f32 1.0, %v861
    %v863 = vmul.f32 %v862, 2.0
    %v864 = vsub.f32 %v863, 1.0
    %v865 = vmul.f32 %v862, %v796
    %867 = vrot.lane.b32.xlu0 %v864, 64
    %v868 = vpop.permute.xlu0 %867
    %v870 = vmul.f32 %v862, %v868
    %872 = vrot.lane.b32.xlu0 %v870, 32
    %v873 = vpop.permute.xlu0 %872
    %v875 = vadd.f32 %v865, %v873
    %v876 = vtanh.pop %v875
    %878 = vrot.lane.b32.xlu0 %v876, 64
    %v879 = vpop.permute.xlu0 %878
    %v881 = vmul.f32 %v862, %v879
    %883 = vrot.lane.b32.xlu0 %v881, 32
    %v884 = vpop.permute.xlu0 %883
    %886 = vst.msk [vmem:[#allocation3 + $0x38] sm:$0xff] %vm255, %v884
    %v887 = vld [vmem:[#allocation3] sm:$0xff]
    %v888 = vld [vmem:[#allocation3 + $0x8] sm:$0xff]
    %v889 = vld [vmem:[#allocation3 + $0x10] sm:$0xff]
    %v890 = vld [vmem:[#allocation3 + $0x18] sm:$0xff]
    %v891 = vld [vmem:[#allocation3 + $0x20] sm:$0xff]
    %v892 = vld [vmem:[#allocation3 + $0x28] sm:$0xff]
    %v893 = vld [vmem:[#allocation3 + $0x30] sm:$0xff]
    %v894 = vld [vmem:[#allocation3 + $0x38] sm:$0xff]
    %v895 = vpack.c.bf16 %v888, %v887
    %v896 = vpack.c.bf16 %v890, %v889
    %v897 = vpack.c.bf16 %v892, %v891
    %v898 = vpack.c.bf16 %v894, %v893
    %v899 = vld [vmem:[#allocation9 + $0x64] sm:$0x1]
    %v900 = vunpack.c.l.bf16 %v899
    %v901 = vld [vmem:[#allocation9 + $0xa8] sm:$0x1]
    %v902 = vunpack.c.l.bf16 %v901
    %v903 = vld [vmem:[#allocation9 + $0x54] sm:$0xf]
    %v904 = vld [vmem:[#allocation9 + $0x58] sm:$0xf]
    %v905 = vld [vmem:[#allocation9 + $0x5c] sm:$0xf]
    %v906 = vld [vmem:[#allocation9 + $0x60] sm:$0xf]
    %v907 = vlaneseq
    %v908 = vshrl.u32 %v907, 7
    %v909 = vsub.s32 0, %v908
    %v910 = vrot.slane %v900, %v909
    %v915 = vunpack.c.l.b16 %v903
    %v916 = vunpack.c.l.b16 %v904
    %v917 = vunpack.c.l.b16 %v905
    %v918 = vunpack.c.l.b16 %v906
    %v919 = vpack.c.b16 %v916, %v915
    %v920 = vpack.c.b16 %v918, %v917
    %v924 = vsel %vm255, %v895, 0
    %v927 = vsel %vm255, %v896, 0
    %v930 = vsel %vm255, %v897, 0
    %v933 = vsel %vm255, %v898, 0
    %935 = vmatprep.subr.bf16.mxu0 0
    %936 = vmatpush1.bf16.msra.mxu0 0
    %937 = vmatprep.subr.bf16.mxu0 0
    %938 = vmatpush1.bf16.msra.mxu0 0
    %939 = vmatprep.subr.bf16.mxu0 0
    %940 = vmatpush1.bf16.msra.mxu0 0
    %941 = vmatprep.subr.bf16.mxu0 0
    %942 = vmatpush1.bf16.msra.mxu0 0
    %943 = vmatprep.subr.bf16.mxu0 0
    %944 = vmatpush1.bf16.msra.mxu0 0
    %945 = vmatprep.subr.bf16.mxu0 0
    %946 = vmatpush1.bf16.msra.mxu0 0
    %947 = vmatprep.subr.bf16.mxu0 0
    %948 = vmatpush1.bf16.msra.mxu0 %v920
    %949 = vmatprep.subr.bf16.mxu0 0
    %950 = vmatpush1.bf16.msra.mxu0 %v919
    %951 = vmatprep.subr.bf16.mxu0 0
    %952 = vmatpush2.bf16.msra.mxu0 0
    %953 = vmatprep.subr.bf16.mxu0 0
    %954 = vmatpush2.bf16.msra.mxu0 0
    %955 = vmatprep.subr.bf16.mxu0 0
    %956 = vmatpush2.bf16.msra.mxu0 0
    %957 = vmatprep.subr.bf16.mxu0 0
    %958 = vmatpush2.bf16.msra.mxu0 0
    %959 = vmatprep.subr.bf16.mxu0 0
    %960 = vmatpush2.bf16.msra.mxu0 0
    %961 = vmatprep.subr.bf16.mxu0 0
    %962 = vmatpush2.bf16.msra.mxu0 0
    %963 = vmatprep.subr.bf16.mxu0 0
    %964 = vmatpush2.bf16.msra.mxu0 0
    %965 = vmatprep.subr.bf16.mxu0 0
    %966 = vmatpush2.bf16.msra.mxu0 0
    %967 = vmatprep.mubr.bf16.mxu0 0
    %968 = vmatmul.mubr.bf16.gmra.mxu0 %v924
    %v969 = vpop.f32.mrf.mxu0
    %v970 = vadd.f32 %v910, %v969
    %v971 = vpop.f32.mrf.mxu0
    %v972 = vpop.f32.mrf.mxu0
    %v973 = vadd.f32 %v910, %v972
    %v974 = vpop.f32.mrf.mxu0
    %975 = vmatprep.mubr.bf16.mxu0 0
    %976 = vmatmul.mubr.bf16.gmra.mxu0 %v927
    %v977 = vpop.f32.mrf.mxu0
    %v978 = vadd.f32 %v910, %v977
    %v979 = vpop.f32.mrf.mxu0
    %v980 = vpop.f32.mrf.mxu0
    %v981 = vadd.f32 %v910, %v980
    %v982 = vpop.f32.mrf.mxu0
    %983 = vmatprep.mubr.bf16.mxu0 0
    %984 = vmatmul.mubr.bf16.gmra.mxu0 %v930
    %v985 = vpop.f32.mrf.mxu0
    %v986 = vadd.f32 %v910, %v985
    %v987 = vpop.f32.mrf.mxu0
    %v988 = vpop.f32.mrf.mxu0
    %v989 = vadd.f32 %v910, %v988
    %v990 = vpop.f32.mrf.mxu0
    %991 = vmatprep.mubr.bf16.mxu0 0
    %992 = vmatmul.mubr.bf16.gmra.mxu0 %v933
    %v993 = vpop.f32.mrf.mxu0
    %v994 = vadd.f32 %v910, %v993
    %v995 = vpop.f32.mrf.mxu0
    %v996 = vpop.f32.mrf.mxu0
    %v997 = vadd.f32 %v910, %v996
    %v998 = vpop.f32.mrf.mxu0
    %999 = vdwg.mxu0
    %v1000 = vmax.f32 %v970, 0.0
    %v1001 = vmax.f32 %v973, 0.0
    %v1002 = vmax.f32 %v978, 0.0
    %v1003 = vmax.f32 %v981, 0.0
    %v1004 = vmax.f32 %v986, 0.0
    %v1005 = vmax.f32 %v989, 0.0
    %v1006 = vmax.f32 %v994, 0.0
    %v1007 = vmax.f32 %v997, 0.0
    %v1008 = vpack.c.bf16 %v1001, %v1000
    %v1009 = vpack.c.bf16 %v1003, %v1002
    %v1010 = vpack.c.bf16 %v1005, %v1004
    %v1011 = vpack.c.bf16 %v1007, %v1006
    %v1012 = vld [vmem:[#allocation9 + $0x68] sm:$0xf]
    %v1013 = vld [vmem:[#allocation9 + $0x6c] sm:$0xf]
    %v1014 = vld [vmem:[#allocation9 + $0x70] sm:$0xf]
    %v1015 = vld [vmem:[#allocation9 + $0x74] sm:$0xf]
    %v1016 = vld [vmem:[#allocation9 + $0x78] sm:$0xf]
    %v1017 = vld [vmem:[#allocation9 + $0x7c] sm:$0xf]
    %v1018 = vld [vmem:[#allocation9 + $0x80] sm:$0xf]
    %v1019 = vld [vmem:[#allocation9 + $0x84] sm:$0xf]
    %v1020 = vld [vmem:[#allocation9 + $0x88] sm:$0xf]
    %v1021 = vld [vmem:[#allocation9 + $0x8c] sm:$0xf]
    %v1022 = vld [vmem:[#allocation9 + $0x90] sm:$0xf]
    %v1023 = vld [vmem:[#allocation9 + $0x94] sm:$0xf]
    %v1024 = vld [vmem:[#allocation9 + $0x98] sm:$0xf]
    %v1025 = vld [vmem:[#allocation9 + $0x9c] sm:$0xf]
    %v1026 = vld [vmem:[#allocation9 + $0xa0] sm:$0xf]
    %v1027 = vld [vmem:[#allocation9 + $0xa4] sm:$0xf]
    %v1028 = vlaneseq
    %v1029 = vshrl.u32 %v1028, 7
    %v1030 = vsub.s32 0, %v1029
    %v1031 = vrot.slane %v902, %v1030
    %v1048 = vunpack.c.l.b16 %v1012
    %v1049 = vunpack.c.l.b16 %v1013
    %v1050 = vunpack.c.l.b16 %v1014
    %v1051 = vunpack.c.l.b16 %v1015
    %v1052 = vunpack.c.l.b16 %v1016
    %v1053 = vunpack.c.l.b16 %v1017
    %v1054 = vunpack.c.l.b16 %v1018
    %v1055 = vunpack.c.l.b16 %v1019
    %v1056 = vunpack.c.l.b16 %v1020
    %v1057 = vunpack.c.l.b16 %v1021
    %v1058 = vunpack.c.l.b16 %v1022
    %v1059 = vunpack.c.l.b16 %v1023
    %v1060 = vunpack.c.l.b16 %v1024
    %v1061 = vunpack.c.l.b16 %v1025
    %v1062 = vunpack.c.l.b16 %v1026
    %v1063 = vunpack.c.l.b16 %v1027
    %v1064 = vpack.c.b16 %v1049, %v1048
    %v1065 = vpack.c.b16 %v1051, %v1050
    %v1066 = vpack.c.b16 %v1053, %v1052
    %v1067 = vpack.c.b16 %v1055, %v1054
    %v1068 = vpack.c.b16 %v1057, %v1056
    %v1069 = vpack.c.b16 %v1059, %v1058
    %v1070 = vpack.c.b16 %v1061, %v1060
    %v1071 = vpack.c.b16 %v1063, %v1062
    %1080 = vmatprep.subr.bf16.mxu0 0
    %1081 = vmatpush1.bf16.msra.mxu0 %v1071
    %1082 = vmatprep.subr.bf16.mxu0 0
    %1083 = vmatpush1.bf16.msra.mxu0 %v1070
    %1084 = vmatprep.subr.bf16.mxu0 0
    %1085 = vmatpush1.bf16.msra.mxu0 %v1069
    %1086 = vmatprep.subr.bf16.mxu0 0
    %1087 = vmatpush1.bf16.msra.mxu0 %v1068
    %1088 = vmatprep.subr.bf16.mxu0 0
    %1089 = vmatpush1.bf16.msra.mxu0 %v1067
    %1090 = vmatprep.subr.bf16.mxu0 0
    %1091 = vmatpush1.bf16.msra.mxu0 %v1066
    %1092 = vmatprep.subr.bf16.mxu0 0
    %1093 = vmatpush1.bf16.msra.mxu0 %v1065
    %1094 = vmatprep.subr.bf16.mxu0 0
    %1095 = vmatpush1.bf16.msra.mxu0 %v1064
    %1096 = vmatprep.subr.bf16.mxu0 0
    %1097 = vmatpush2.bf16.msra.mxu0 0
    %1098 = vmatprep.subr.bf16.mxu0 0
    %1099 = vmatpush2.bf16.msra.mxu0 0
    %1100 = vmatprep.subr.bf16.mxu0 0
    %1101 = vmatpush2.bf16.msra.mxu0 0
    %1102 = vmatprep.subr.bf16.mxu0 0
    %1103 = vmatpush2.bf16.msra.mxu0 0
    %1104 = vmatprep.subr.bf16.mxu0 0
    %1105 = vmatpush2.bf16.msra.mxu0 0
    %1106 = vmatprep.subr.bf16.mxu0 0
    %1107 = vmatpush2.bf16.msra.mxu0 0
    %1108 = vmatprep.subr.bf16.mxu0 0
    %1109 = vmatpush2.bf16.msra.mxu0 0
    %1110 = vmatprep.subr.bf16.mxu0 0
    %1111 = vmatpush2.bf16.msra.mxu0 0
    %1112 = vmatprep.mubr.bf16.mxu0 0
    %1113 = vmatmul.mubr.bf16.gmra.mxu0 %v1008
    %v1114 = vpop.f32.mrf.mxu0
    %v1115 = vadd.f32 %v1031, %v1114
    %v1116 = vpop.f32.mrf.mxu0
    %v1117 = vpop.f32.mrf.mxu0
    %v1118 = vadd.f32 %v1031, %v1117
    %v1119 = vpop.f32.mrf.mxu0
    %1120 = vmatprep.mubr.bf16.mxu0 0
    %1121 = vmatmul.mubr.bf16.gmra.mxu0 %v1009
    %v1122 = vpop.f32.mrf.mxu0
    %v1123 = vadd.f32 %v1031, %v1122
    %v1124 = vpop.f32.mrf.mxu0
    %v1125 = vpop.f32.mrf.mxu0
    %v1126 = vadd.f32 %v1031, %v1125
    %v1127 = vpop.f32.mrf.mxu0
    %1128 = vmatprep.mubr.bf16.mxu0 0
    %1129 = vmatmul.mubr.bf16.gmra.mxu0 %v1010
    %v1130 = vpop.f32.mrf.mxu0
    %v1131 = vadd.f32 %v1031, %v1130
    %v1132 = vpop.f32.mrf.mxu0
    %v1133 = vpop.f32.mrf.mxu0
    %v1134 = vadd.f32 %v1031, %v1133
    %v1135 = vpop.f32.mrf.mxu0
    %1136 = vmatprep.mubr.bf16.mxu0 0
    %1137 = vmatmul.mubr.bf16.gmra.mxu0 %v1011
    %v1138 = vpop.f32.mrf.mxu0
    %v1139 = vadd.f32 %v1031, %v1138
    %v1140 = vpop.f32.mrf.mxu0
    %v1141 = vpop.f32.mrf.mxu0
    %v1142 = vadd.f32 %v1031, %v1141
    %v1143 = vpop.f32.mrf.mxu0
    %1144 = vdwg.mxu0
    %1145 = vst [vmem:[#allocation10] sm:$0xff] %v1115
    %1146 = vst [vmem:[#allocation10 + $0x8] sm:$0xff] %v1118
    %1147 = vst [vmem:[#allocation10 + $0x10] sm:$0xff] %v1123
    %1148 = vst [vmem:[#allocation10 + $0x18] sm:$0xff] %v1126
    %1149 = vst [vmem:[#allocation10 + $0x20] sm:$0xff] %v1131
    %1150 = vst [vmem:[#allocation10 + $0x28] sm:$0xff] %v1134
    %1151 = vst [vmem:[#allocation10 + $0x30] sm:$0xff] %v1139
    %1152 = vst [vmem:[#allocation10 + $0x38] sm:$0xff] %v1142
    %1153 = vst.msk [vmem:[#allocation11] sm:$0xff] %vm255, %v884
    %1155 = vrot.lane.b32.xlu0 %v875, 96
    %v1156 = vpop.permute.xlu0 %1155
    %1158 = vst.msk [vmem:[#allocation13] sm:$0xff] %vm255, %v1156
    // Predicated region
    $region30: #{tpu_custom_call.1} parent=1 // pred_check
      _
    $region31: #{tpu_custom_call.1} parent=1 // pred_check_branch
      %1160 = sbr.rel (0) target = $region33
    $region32: #{tpu_custom_call.1} parent=1 // pred_region
      %s1162 = ssub.s32 1024, 1024
      %1163 = vsyncadd [#allocation6], %s1162
      %s1164 = sshll.u32 [#allocation10], 4
      %s1165 = int_to_ptr.vmem [resolvable:$true] %s1164
      %1170 = dma.vmem_to_hbm [thread:$0]  %s1165, 1024, %s4, [#allocation6], 128, 128, 8
    $region33: #{tpu_custom_call.1} parent=1 // pred_fallthru
      _
    // Predicated region
    $region34: #{tpu_custom_call.1} parent=1 // pred_check
      _
    $region35: #{tpu_custom_call.1} parent=1 // pred_check_branch
      %1172 = sbr.rel (0) target = $region37
    $region36: #{tpu_custom_call.1} parent=1 // pred_region
      %s1174 = ssub.s32 128, 128
      %1175 = vsyncadd [#allocation12], %s1174
      %s1177 = sshll.u32 [#allocation11], 4
      %s1178 = int_to_ptr.vmem [resolvable:$true] %s1177
      %1180 = dma.vmem_to_hbm [thread:$0]  %s1178, 128, %s5, [#allocation12]
    $region37: #{tpu_custom_call.1} parent=1 // pred_fallthru
      _
    // Predicated region
    $region38: #{tpu_custom_call.1} parent=1 // pred_check
      _
    $region39: #{tpu_custom_call.1} parent=1 // pred_check_branch
      %1182 = sbr.rel (0) target = $region41
    $region40: #{tpu_custom_call.1} parent=1 // pred_region
      %s1184 = ssub.s32 128, 128
      %1185 = vsyncadd [#allocation12], %s1184
      %s1187 = sshll.u32 [#allocation13], 4
      %s1188 = int_to_ptr.vmem [resolvable:$true] %s1187
      %1190 = dma.vmem_to_hbm [thread:$0]  %s1188, 128, %s6, [#allocation12]
    $region41: #{tpu_custom_call.1} parent=1 // pred_fallthru
      _
    // Predicated region
    $region42: #{tpu_custom_call.1} parent=1 // pred_check
      _
    $region43: #{tpu_custom_call.1} parent=1 // pred_check_branch
      %1192 = sbr.rel (0) target = $region45
    $region44: #{tpu_custom_call.1} parent=1 // pred_region
      %1193 = dma.done [#allocation6], 1024
    $region45: #{tpu_custom_call.1} parent=1 // pred_fallthru
      _
    // Predicated region
    $region46: #{tpu_custom_call.1} parent=1 // pred_check
      _
    $region47: #{tpu_custom_call.1} parent=1 // pred_check_branch
      %1195 = sbr.rel (0) target = $region49
    $region48: #{tpu_custom_call.1} parent=1 // pred_region
      %1196 = dma.done [#allocation12], 128
    $region49: #{tpu_custom_call.1} parent=1 // pred_fallthru
      _
    // Predicated region
    $region50: #{tpu_custom_call.1} parent=1 // pred_check
      _
    $region51: #{tpu_custom_call.1} parent=1 // pred_check_branch
      %1198 = sbr.rel (0) target = $region53
    $region52: #{tpu_custom_call.1} parent=1 // pred_region
      %1199 = dma.done [#allocation12], 128
    $region53: #{tpu_custom_call.1} parent=1 // pred_fallthru
      _
    %1200 = vsyncpa [#allocation5], 1
    %1201 = vsyncpa [#allocation8], 1
    %1202 = vsyncpa [#allocation6], 1
    %1203 = vsyncpa [#allocation12], 1

</llo_original>
